<compile_context>
chip_gen: v7x
topology: tpu7x:2x2x1
jax: 0.10.0
libtpu: 0.0.40
codegen_flags: <defaults>
</compile_context>

<pallas_src>
import jax
import jax.numpy as jnp
import numpy as np
from jax import lax
from jax.experimental import pallas as pl
from jax.experimental.pallas import tpu as pltpu


def _round_up(x, m):
    return ((x + m - 1) // m) * m


def concat_mlp_kernel(uid_ref, bid_ref,        # (Bt, 1) int32 ids (VMEM, blocked)
                      uw_ref, bw_ref,          # folded tables (V_pad, H) bf16, resident
                      b1_ref,                  # (1, H) f32, resident
                      w2_ref,                  # (1, H) bf16, resident
                      b2_ref,                  # (1, 1) f32 SMEM scalar
                      o_ref):                  # (1, Bt) f32 lane-dense output tile
    bt = uid_ref.shape[0]
    vu = uw_ref.shape[0]
    vb = bw_ref.shape[0]
    cdt = uw_ref.dtype

    uid = uid_ref[...]                         # (Bt, 1) int32
    bid = bid_ref[...]

    # Vectorized one-hot "gather" on the MXU (no scalar-indexed row copies).
    oh_u = jnp.where(uid == lax.broadcasted_iota(jnp.int32, (bt, vu), 1),
                     1.0, 0.0).astype(cdt)     # (Bt, Vu_pad) bf16
    oh_b = jnp.where(bid == lax.broadcasted_iota(jnp.int32, (bt, vb), 1),
                     1.0, 0.0).astype(cdt)     # (Bt, Vb_pad) bf16

    # concat + Linear(2E, H) with the embedding tables pre-folded into W1:
    #   h = E_u[uid] @ W1[:E] + E_b[bid] @ W1[E:] + b1
    h = (jnp.dot(oh_u, uw_ref[...], preferred_element_type=jnp.float32)
         + jnp.dot(oh_b, bw_ref[...], preferred_element_type=jnp.float32)
         + b1_ref[...])
    # LeakyReLU (PyTorch default negative_slope = 0.01), f32
    h = jnp.where(h >= 0, h, 0.01 * h)

    # Linear(H, 1) head, produced lane-dense as (1, Bt):
    # contract w2 (1,H) with h (Bt,H) over H -> (1, Bt).  bf16 MXU inputs.
    y = lax.dot_general(w2_ref[...], h.astype(cdt), (((1,), (1,)), ((), ())),
                        preferred_element_type=jnp.float32)
    y = y + b2_ref[0, 0]

    # 1 + 4 * sigmoid(y): exp on the EUP slot, approx reciprocal also on EUP.
    o_ref[...] = 1.0 + 4.0 * pl.reciprocal(1.0 + jnp.exp(-y), approx=True)


def concat_model_forward(user_id, book_id, params, *, block_b=256,
                         param_dtype=jnp.bfloat16):
    E = params["user_emb"].shape[1]
    H = params["b1"].shape[1]
    Vu = params["user_emb"].shape[0]
    Vb = params["book_emb"].shape[0]
    B = user_id.shape[0]

    n_tiles = pl.cdiv(B, block_b)
    b_pad = n_tiles * block_b

    # Clamp (nn.Embedding has no OOB tolerance; an unclamped id would silently
    # select a zero pad row), pad batch to a tile multiple, and shape (b_pad, 1)
    # so the kernel broadcasts against the lane-axis iota without a relayout.
    uid = jnp.clip(user_id.astype(jnp.int32), 0, Vu - 1)
    bid = jnp.clip(book_id.astype(jnp.int32), 0, Vb - 1)
    uid = jnp.zeros((b_pad, 1), jnp.int32).at[:B, 0].set(uid)
    bid = jnp.zeros((b_pad, 1), jnp.int32).at[:B, 0].set(bid)

    # Small-vocab fast path: fold each embedding table into the first Linear.
    # Pad the vocab axis to a multiple of 128 so the in-kernel one-hot matmul
    # contraction is lane-aligned.  Folded tables stay VMEM-resident (tiny).
    uw = jnp.dot(params["user_emb"], params["w1"][:E],
                 preferred_element_type=jnp.float32)            # (Vu, H)
    bw = jnp.dot(params["book_emb"], params["w1"][E:],
                 preferred_element_type=jnp.float32)            # (Vb, H)
    vu_pad = _round_up(Vu, 128)
    vb_pad = _round_up(Vb, 128)
    uw = jnp.zeros((vu_pad, H), jnp.float32).at[:Vu].set(uw).astype(param_dtype)
    bw = jnp.zeros((vb_pad, H), jnp.float32).at[:Vb].set(bw).astype(param_dtype)

    b1 = params["b1"].reshape(1, H).astype(jnp.float32)
    w2 = params["w2"].reshape(1, H).astype(param_dtype)
    b2 = params["b2"].reshape(1, 1).astype(jnp.float32)

    def resident(shape):
        return pl.BlockSpec(shape, lambda i: (0,) * len(shape))

    out = pl.pallas_call(
        concat_mlp_kernel,
        out_shape=jax.ShapeDtypeStruct((1, b_pad), jnp.float32),
        grid_spec=pl.GridSpec(
            grid=(n_tiles,),
            in_specs=[
                pl.BlockSpec((block_b, 1), lambda i: (i, 0)),    # user ids (blocked)
                pl.BlockSpec((block_b, 1), lambda i: (i, 0)),    # book ids (blocked)
                resident(uw.shape),                              # folded user table
                resident(bw.shape),                              # folded book table
                resident(b1.shape),
                resident(w2.shape),
                pl.BlockSpec(memory_space=pltpu.MemorySpace.SMEM),  # b2 scalar
            ],
            out_specs=pl.BlockSpec((1, block_b), lambda i: (0, i)),
        ),
        compiler_params=pltpu.CompilerParams(
            dimension_semantics=("parallel",),   # batch tiles shard across TCs (v7x)
        ),
    )(uid, bid, uw, bw, b1, w2, b2)

    return out[0, :B].reshape(B, 1)


def init_params(key, num_users, num_books, embedding_dim, hidden_dim):
    k = jax.random.split(key, 6)

    def xavier_uniform(rng, shape):
        bound = float(np.sqrt(6.0 / (shape[0] + shape[1])))
        return jax.random.uniform(rng, shape, jnp.float32, -bound, bound)

    def linear_init(rng_w, rng_b, fan_in, fan_out):
        # PyTorch default Linear init: U(-1/sqrt(fan_in), 1/sqrt(fan_in))
        bound = 1.0 / float(np.sqrt(fan_in))
        w = jax.random.uniform(rng_w, (fan_in, fan_out), jnp.float32, -bound, bound)
        b = jax.random.uniform(rng_b, (1, fan_out), jnp.float32, -bound, bound)
        return w, b

    user_emb = xavier_uniform(k[0], (num_users, embedding_dim))
    book_emb = xavier_uniform(k[1], (num_books, embedding_dim))
    w1, b1 = linear_init(k[2], k[3], 2 * embedding_dim, hidden_dim)
    w2, b2 = linear_init(k[4], k[5], hidden_dim, 1)
    return {
        "user_emb": user_emb, "book_emb": book_emb,
        "w1": w1, "b1": b1, "w2": w2, "b2": b2,
    }


def reference_forward(user_id, book_id, params, param_dtype=jnp.bfloat16):
    # Plain-JAX reference mirroring the kernel's algebraic folding and precision
    # choices (bf16 folded tables / bf16 head inputs, f32 accumulation & math).
    # Mathematically identical to: concat(E_u[uid], E_b[bid]) @ W1 + b1 -> ...
    E = params["user_emb"].shape[1]
    uw = jnp.dot(params["user_emb"], params["w1"][:E],
                 preferred_element_type=jnp.float32).astype(param_dtype)
    bw = jnp.dot(params["book_emb"], params["w1"][E:],
                 preferred_element_type=jnp.float32).astype(param_dtype)
    h = (uw[user_id].astype(jnp.float32) + bw[book_id].astype(jnp.float32)
         + params["b1"])
    h = jnp.where(h >= 0, h, 0.01 * h)
    y = jnp.dot(h.astype(param_dtype), params["w2"].astype(param_dtype),
                preferred_element_type=jnp.float32) + params["b2"]
    return 1.0 + 4.0 * (1.0 / (1.0 + jnp.exp(-y)))


if __name__ == "__main__":
    num_users, num_books = 10, 20
    embedding_dim, hidden_dim = 16, 128
    batch = 300    # not a multiple of block_b=256: exercises padding + a 2-step grid

    key = jax.random.PRNGKey(0)
    kp, ku, kb = jax.random.split(key, 3)
    params = init_params(kp, num_users, num_books, embedding_dim, hidden_dim)

    user_id = jax.random.randint(ku, (batch,), 0, num_users)
    book_id = jax.random.randint(kb, (batch,), 0, num_books)

    out = jax.block_until_ready(concat_model_forward(user_id, book_id, params))
    ref = jax.block_until_ready(reference_forward(user_id, book_id, params))

    assert out.shape == (batch, 1)
    np.testing.assert_allclose(np.asarray(out), np.asarray(ref), rtol=2e-3, atol=2e-3)
    print("KERNEL_OK")
</pallas_src>

<mosaic_0001>
module attributes {stable_mosaic.version = 11 : i64} {
  func.func @concat_mlp_kernel(%arg0: i32, %arg1: memref<256x1xi32, #tpu.memory_space<vmem>>, %arg2: memref<256x1xi32, #tpu.memory_space<vmem>>, %arg3: memref<128x128xbf16, #tpu.memory_space<vmem>>, %arg4: memref<128x128xbf16, #tpu.memory_space<vmem>>, %arg5: memref<1x128xf32, #tpu.memory_space<vmem>>, %arg6: memref<1x128xbf16, #tpu.memory_space<vmem>>, %arg7: memref<1x1xf32, #tpu.memory_space<smem>>, %arg8: memref<1x256xf32, #tpu.memory_space<vmem>>) attributes {dimension_semantics = [#tpu.dimension_semantics<parallel>], iteration_bounds = array<i64: 2>, scalar_prefetch = 0 : i64, scratch_operands = 0 : i64, tpu.core_type = #tpu.core_type<tc>, window_params = [{transform_indices = @transform_0, window_bounds = array<i64: 256, 1>}, {transform_indices = @transform_1, window_bounds = array<i64: 256, 1>}, {pipeline_mode = #tpu.pipeline_mode<synchronous>, transform_indices = @transform_2, window_bounds = array<i64: 128, 128>}, {pipeline_mode = #tpu.pipeline_mode<synchronous>, transform_indices = @transform_3, window_bounds = array<i64: 128, 128>}, {pipeline_mode = #tpu.pipeline_mode<synchronous>, transform_indices = @transform_4, window_bounds = array<i64: 1, 128>}, {pipeline_mode = #tpu.pipeline_mode<synchronous>, transform_indices = @transform_5, window_bounds = array<i64: 1, 128>}, {transform_indices = @transform_6, window_bounds = array<i64: 1, 1>}, {transform_indices = @transform_7, window_bounds = array<i64: 1, 256>}]} {
    %c0 = arith.constant 0 : index
    %c0_0 = arith.constant 0 : index
    %0 = vector.load %arg1[%c0, %c0_0] : memref<256x1xi32, #tpu.memory_space<vmem>>, vector<256x1xi32>
    %c0_1 = arith.constant 0 : index
    %c0_2 = arith.constant 0 : index
    %1 = vector.load %arg2[%c0_1, %c0_2] : memref<256x1xi32, #tpu.memory_space<vmem>>, vector<256x1xi32>
    %2 = tpu.iota {dimensions = array<i32: 1>} : vector<256x128xi32>
    %3 = vector.broadcast %0 : vector<256x1xi32> to vector<256x128xi32>
    %4 = arith.cmpi eq, %3, %2 : vector<256x128xi32>
    %cst = arith.constant 1.000000e+00 : f32
    %cst_3 = arith.constant 0.000000e+00 : f32
    %5 = vector.broadcast %cst : f32 to vector<256x128xf32>
    %6 = vector.broadcast %cst_3 : f32 to vector<256x128xf32>
    %7 = arith.select %4, %5, %6 : vector<256x128xi1>, vector<256x128xf32>
    %8 = arith.truncf %7 : vector<256x128xf32> to vector<256x128xbf16>
    %9 = tpu.iota {dimensions = array<i32: 1>} : vector<256x128xi32>
    %10 = vector.broadcast %1 : vector<256x1xi32> to vector<256x128xi32>
    %11 = arith.cmpi eq, %10, %9 : vector<256x128xi32>
    %cst_4 = arith.constant 1.000000e+00 : f32
    %cst_5 = arith.constant 0.000000e+00 : f32
    %12 = vector.broadcast %cst_4 : f32 to vector<256x128xf32>
    %13 = vector.broadcast %cst_5 : f32 to vector<256x128xf32>
    %14 = arith.select %11, %12, %13 : vector<256x128xi1>, vector<256x128xf32>
    %15 = arith.truncf %14 : vector<256x128xf32> to vector<256x128xbf16>
    %c0_6 = arith.constant 0 : index
    %c0_7 = arith.constant 0 : index
    %16 = vector.load %arg3[%c0_6, %c0_7] : memref<128x128xbf16, #tpu.memory_space<vmem>>, vector<128x128xbf16>
    %cst_8 = arith.constant dense<0.000000e+00> : vector<256x128xf32>
    %17 = tpu.matmul %8, %16, %cst_8 {dimension_numbers = #tpu.dot_dimension_numbers<[1], [0], [0], [1], [0, 0, 1, 1], [], []>} : vector<256x128xbf16>, vector<128x128xbf16>, vector<256x128xf32> -> vector<256x128xf32>
    %c0_9 = arith.constant 0 : index
    %c0_10 = arith.constant 0 : index
    %18 = vector.load %arg4[%c0_9, %c0_10] : memref<128x128xbf16, #tpu.memory_space<vmem>>, vector<128x128xbf16>
    %cst_11 = arith.constant dense<0.000000e+00> : vector<256x128xf32>
    %19 = tpu.matmul %15, %18, %cst_11 {dimension_numbers = #tpu.dot_dimension_numbers<[1], [0], [0], [1], [0, 0, 1, 1], [], []>} : vector<256x128xbf16>, vector<128x128xbf16>, vector<256x128xf32> -> vector<256x128xf32>
    %20 = arith.addf %17, %19 : vector<256x128xf32>
    %c0_12 = arith.constant 0 : index
    %c0_13 = arith.constant 0 : index
    %21 = vector.load %arg5[%c0_12, %c0_13] : memref<1x128xf32, #tpu.memory_space<vmem>>, vector<1x128xf32>
    %22 = vector.broadcast %21 : vector<1x128xf32> to vector<256x128xf32>
    %23 = arith.addf %20, %22 : vector<256x128xf32>
    %cst_14 = arith.constant 0.000000e+00 : f32
    %24 = vector.broadcast %cst_14 : f32 to vector<256x128xf32>
    %25 = arith.cmpf oge, %23, %24 : vector<256x128xf32>
    %cst_15 = arith.constant 0.00999999977 : f32
    %26 = vector.broadcast %cst_15 : f32 to vector<256x128xf32>
    %27 = arith.mulf %26, %23 : vector<256x128xf32>
    %28 = arith.select %25, %23, %27 : vector<256x128xi1>, vector<256x128xf32>
    %c0_16 = arith.constant 0 : index
    %c0_17 = arith.constant 0 : index
    %29 = vector.load %arg6[%c0_16, %c0_17] : memref<1x128xbf16, #tpu.memory_space<vmem>>, vector<1x128xbf16>
    %30 = arith.truncf %28 : vector<256x128xf32> to vector<256x128xbf16>
    %cst_18 = arith.constant dense<0.000000e+00> : vector<1x256xf32>
    %31 = tpu.matmul %29, %30, %cst_18 {dimension_numbers = #tpu.dot_dimension_numbers<[1], [1], [0], [0], [0, 0, 1, 0], [], []>} : vector<1x128xbf16>, vector<256x128xbf16>, vector<1x256xf32> -> vector<1x256xf32>
    %c0_19 = arith.constant 0 : index
    %c0_20 = arith.constant 0 : index
    %32 = memref.load %arg7[%c0_19, %c0_20] : memref<1x1xf32, #tpu.memory_space<smem>>
    %33 = vector.broadcast %32 : f32 to vector<1x256xf32>
    %34 = arith.addf %31, %33 : vector<1x256xf32>
    %cst_21 = arith.constant 0.000000e+00 : f32
    %35 = vector.broadcast %cst_21 : f32 to vector<1x256xf32>
    %36 = arith.subf %35, %34 : vector<1x256xf32>
    %37 = math.exp %36 : vector<1x256xf32>
    %cst_22 = arith.constant 1.000000e+00 : f32
    %38 = vector.broadcast %cst_22 : f32 to vector<1x256xf32>
    %39 = arith.addf %38, %37 : vector<1x256xf32>
    %40 = tpu.reciprocal %39 {approx = true} : vector<1x256xf32> -> vector<1x256xf32>
    %cst_23 = arith.constant 4.000000e+00 : f32
    %41 = vector.broadcast %cst_23 : f32 to vector<1x256xf32>
    %42 = arith.mulf %41, %40 : vector<1x256xf32>
    %cst_24 = arith.constant 1.000000e+00 : f32
    %43 = vector.broadcast %cst_24 : f32 to vector<1x256xf32>
    %44 = arith.addf %43, %42 : vector<1x256xf32>
    %c0_25 = arith.constant 0 : index
    %c0_26 = arith.constant 0 : index
    %45 = vector.load %arg8[%c0_25, %c0_26] : memref<1x256xf32, #tpu.memory_space<vmem>>, vector<1x256xf32>
    tpu.vector_store %arg8[%c0_25, %c0_26], %44 {strides = array<i32>} : memref<1x256xf32, #tpu.memory_space<vmem>>, vector<1x256xf32>,
    return
  }
  func.func @transform_0(%arg0: i32) -> (i32, i32) {
    %c0_i32 = arith.constant 0 : i32
    %c0_i32_0 = arith.constant 0 : i32
    return %arg0, %c0_i32 : i32, i32
  }
  func.func @transform_1(%arg0: i32) -> (i32, i32) {
    %c0_i32 = arith.constant 0 : i32
    %c0_i32_0 = arith.constant 0 : i32
    return %arg0, %c0_i32 : i32, i32
  }
  func.func @transform_2(%arg0: i32) -> (i32, i32) {
    %c0_i32 = arith.constant 0 : i32
    %c0_i32_0 = arith.constant 0 : i32
    %c0_i32_1 = arith.constant 0 : i32
    return %c0_i32, %c0_i32_0 : i32, i32
  }
  func.func @transform_3(%arg0: i32) -> (i32, i32) {
    %c0_i32 = arith.constant 0 : i32
    %c0_i32_0 = arith.constant 0 : i32
    %c0_i32_1 = arith.constant 0 : i32
    return %c0_i32, %c0_i32_0 : i32, i32
  }
  func.func @transform_4(%arg0: i32) -> (i32, i32) {
    %c0_i32 = arith.constant 0 : i32
    %c0_i32_0 = arith.constant 0 : i32
    %c0_i32_1 = arith.constant 0 : i32
    return %c0_i32, %c0_i32_0 : i32, i32
  }
  func.func @transform_5(%arg0: i32) -> (i32, i32) {
    %c0_i32 = arith.constant 0 : i32
    %c0_i32_0 = arith.constant 0 : i32
    %c0_i32_1 = arith.constant 0 : i32
    return %c0_i32, %c0_i32_0 : i32, i32
  }
  func.func @transform_6(%arg0: i32) -> (i32, i32) {
    %c0_i32 = arith.constant 0 : i32
    %c0_i32_0 = arith.constant 0 : i32
    %c0_i32_1 = arith.constant 0 : i32
    return %c0_i32, %c0_i32_0 : i32, i32
  }
  func.func @transform_7(%arg0: i32) -> (i32, i32) {
    %c0_i32 = arith.constant 0 : i32
    %c0_i32_0 = arith.constant 0 : i32
    return %c0_i32, %arg0 : i32, i32
  }
}

</mosaic_0001>

<llo_original>
// kernel: tpu_custom_call.1
$region0: #{tpu_custom_call.1}
  #allocation0 [shape = 'u32[]', space=smem, size = 0x4, offset = 0x4, fixed_abs, tag = 'smem constant byte address 0x4 - core index']
  #allocation1 [shape = 'u32[144,128]{1,0:T(1,128)}', space=vmem, size = 0x12000, scoped, tag = 'internal scratch']
  #allocation2 [shape = 'f32[1,1]{1,0:T(1,128)S(6)}', space=smem, size = 0x200, scoped, tag = 'scoped memory for tpu_custom_call.1']
  %s0 = inlined_call_operand.vmem [shape: s32[512,1], index: 0, kind: input, shape index: {}]
  %s1 = inlined_call_operand.vmem [shape: s32[512,1], index: 1, kind: input, shape index: {}]
  %s2 = inlined_call_operand.vmem [shape: bf16[128,128], index: 2, kind: input, shape index: {}]
  %s3 = inlined_call_operand.vmem [shape: bf16[128,128], index: 3, kind: input, shape index: {}]
  %s4 = inlined_call_operand.vmem [shape: f32[1,128], index: 4, kind: input, shape index: {}]
  %s5 = inlined_call_operand.vmem [shape: bf16[1,128], index: 5, kind: input, shape index: {}]
  %s6 = inlined_call_operand.<no memory space> [shape: f32[1,1], index: 6, kind: input, shape index: {}]
  %s7 = inlined_call_operand.hbm [shape: f32[1,512], index: 7, kind: output, shape index: {}]
  %s8 = sld [smem:[#allocation0]]
  $region61: #{tpu_custom_call.1} parent=0
    _
  %s10 = ssub.s32 1, %s8
  %s11 = scalar_select 0, %s10, %s8
  %12 = sst [smem:[#allocation2]] %s6
  $region1: #{tpu_custom_call.1} parent=0
    #allocation3 [shape = 'u8[2048]{0}', space=vmem, size = 0x800, scoped, tag = 'output window, operand 0']
    #allocation4 [shape = 's32[2]{0}', space=sflag, size = 0x8, scoped, tag = 'scoped memory for tpu_custom_call.1']
    %13 = vsyncpa [#allocation4], 0
    %s14 = scalar_lea.sflag [#allocation4], 1
    %15 = vsyncpa %s14, 0
    loop: start=0, step=1, limit=4
    $region2: #{tpu_custom_call.1} parent=1 // loop_pre_header
      _
    $region3: #{tpu_custom_call.1} parent=1 // loop_header
      %s17 = sphi 0, %s21
      %p18 = scmp.ge.s32.totalorder %s17, 4
      %s27 = sphi 0, %s29
      %s30 = sphi 0, %s27
      %s31 = sphi 0, %s30
      %s47 = sphi 0, %s31
      %s53 = sphi 0, %s55
      %s56 = sphi 0, %s53
      %s57 = sphi 0, %s56
      %s73 = sphi 0, %s57
      %s77 = sphi 0, %s77
      %s79 = sphi 0, %s77
      %s80 = sphi 0, %s79
      %s94 = sphi 0, %s80
      %s98 = sphi 0, %s98
      %s100 = sphi 0, %s98
      %s101 = sphi 0, %s100
      %s115 = sphi 0, %s101
      %s119 = sphi 0, %s119
      %s121 = sphi 0, %s119
      %s122 = sphi 0, %s121
      %s136 = sphi 0, %s122
      %s140 = sphi 0, %s140
      %s142 = sphi 0, %s140
      %s143 = sphi 0, %s142
      %s157 = sphi 0, %s143
      %s161 = sphi 0, %s161
      %s163 = sphi 0, %s161
      %s164 = sphi 0, %s163
      %s178 = sphi 0, %s164
      %s184 = sphi 0, %s186
      %s187 = sphi 0, %s184
      %s188 = sphi 0, %s187
      %s204 = sphi 0, %s188
    $region4: #{tpu_custom_call.1} parent=1 // loop_header_branch
      %20 = sbr.rel (%p18) target = $region8
    $region5: #{tpu_custom_call.1} parent=1 // loop_body
      %s22 = ssub.s32 %s17, 1
      %s23 = ssub.s32 %s17, 2
      %s24 = sadd.s32 %s17, 1
      %s25 = ssub.s32 %s17, %s24
      %p26 = scmp.eq.s32.totalorder %s25, 0
      %s28 = sadd.s32 %s27, 1
      %s29 = scalar_select %p26, %s27, %s28
      %p32 = pneg %p26
      %p33 = scmp.eq.s32.totalorder %s17, 1
      %p34 = por %p32, %p33
      %p35 = scmp.ne.s32.totalorder %s27, %s30
      %p36 = scmp.eq.s32.totalorder %s17, 0
      %p37 = por %p35, %p36
      %p38 = scmp.ne.s32.totalorder %s27, %s30
      %p39 = scmp.eq.s32.totalorder %s22, 1
      %p40 = por %p38, %p39
      %p41 = scmp.ne.s32.totalorder %s30, %s31
      %p42 = scmp.eq.s32.totalorder %s22, 0
      %p43 = por %p41, %p42
      %p44 = scmp.ne.s32.totalorder %s30, %s31
      %p45 = scmp.eq.s32.totalorder %s23, 1
      %p46 = por %p44, %p45
      %p48 = scmp.ne.s32.totalorder %s31, %s47
      %p49 = scmp.eq.s32.totalorder %s23, 0
      %p50 = por %p48, %p49
      %s51 = ssub.s32 %s17, %s24
      %p52 = scmp.eq.s32.totalorder %s51, 0
      %s54 = sadd.s32 %s53, 1
      %s55 = scalar_select %p52, %s53, %s54
      %p58 = pneg %p52
      %p59 = scmp.eq.s32.totalorder %s17, 1
      %p60 = por %p58, %p59
      %p61 = scmp.ne.s32.totalorder %s53, %s56
      %p62 = scmp.eq.s32.totalorder %s17, 0
      %p63 = por %p61, %p62
      %p64 = scmp.ne.s32.totalorder %s53, %s56
      %p65 = scmp.eq.s32.totalorder %s22, 1
      %p66 = por %p64, %p65
      %p67 = scmp.ne.s32.totalorder %s56, %s57
      %p68 = scmp.eq.s32.totalorder %s22, 0
      %p69 = por %p67, %p68
      %p70 = scmp.ne.s32.totalorder %s56, %s57
      %p71 = scmp.eq.s32.totalorder %s23, 1
      %p72 = por %p70, %p71
      %p74 = scmp.ne.s32.totalorder %s57, %s73
      %p75 = scmp.eq.s32.totalorder %s23, 0
      %p76 = por %p74, %p75
      %s78 = sadd.s32 %s77, 1
      %p81 = scmp.eq.s32.totalorder %s17, 1
      %p82 = scmp.ne.s32.totalorder %s77, %s79
      %p83 = scmp.eq.s32.totalorder %s17, 0
      %p84 = por %p82, %p83
      %p85 = scmp.ne.s32.totalorder %s77, %s79
      %p86 = scmp.eq.s32.totalorder %s22, 1
      %p87 = por %p85, %p86
      %p88 = scmp.ne.s32.totalorder %s79, %s80
      %p89 = scmp.eq.s32.totalorder %s22, 0
      %p90 = por %p88, %p89
      %p91 = scmp.ne.s32.totalorder %s79, %s80
      %p92 = scmp.eq.s32.totalorder %s23, 1
      %p93 = por %p91, %p92
      %p95 = scmp.ne.s32.totalorder %s80, %s94
      %p96 = scmp.eq.s32.totalorder %s23, 0
      %p97 = por %p95, %p96
      %s99 = sadd.s32 %s98, 1
      %p102 = scmp.eq.s32.totalorder %s17, 1
      %p103 = scmp.ne.s32.totalorder %s98, %s100
      %p104 = scmp.eq.s32.totalorder %s17, 0
      %p105 = por %p103, %p104
      %p106 = scmp.ne.s32.totalorder %s98, %s100
      %p107 = scmp.eq.s32.totalorder %s22, 1
      %p108 = por %p106, %p107
      %p109 = scmp.ne.s32.totalorder %s100, %s101
      %p110 = scmp.eq.s32.totalorder %s22, 0
      %p111 = por %p109, %p110
      %p112 = scmp.ne.s32.totalorder %s100, %s101
      %p113 = scmp.eq.s32.totalorder %s23, 1
      %p114 = por %p112, %p113
      %p116 = scmp.ne.s32.totalorder %s101, %s115
      %p117 = scmp.eq.s32.totalorder %s23, 0
      %p118 = por %p116, %p117
      %s120 = sadd.s32 %s119, 1
      %p123 = scmp.eq.s32.totalorder %s17, 1
      %p124 = scmp.ne.s32.totalorder %s119, %s121
      %p125 = scmp.eq.s32.totalorder %s17, 0
      %p126 = por %p124, %p125
      %p127 = scmp.ne.s32.totalorder %s119, %s121
      %p128 = scmp.eq.s32.totalorder %s22, 1
      %p129 = por %p127, %p128
      %p130 = scmp.ne.s32.totalorder %s121, %s122
      %p131 = scmp.eq.s32.totalorder %s22, 0
      %p132 = por %p130, %p131
      %p133 = scmp.ne.s32.totalorder %s121, %s122
      %p134 = scmp.eq.s32.totalorder %s23, 1
      %p135 = por %p133, %p134
      %p137 = scmp.ne.s32.totalorder %s122, %s136
      %p138 = scmp.eq.s32.totalorder %s23, 0
      %p139 = por %p137, %p138
      %s141 = sadd.s32 %s140, 1
      %p144 = scmp.eq.s32.totalorder %s17, 1
      %p145 = scmp.ne.s32.totalorder %s140, %s142
      %p146 = scmp.eq.s32.totalorder %s17, 0
      %p147 = por %p145, %p146
      %p148 = scmp.ne.s32.totalorder %s140, %s142
      %p149 = scmp.eq.s32.totalorder %s22, 1
      %p150 = por %p148, %p149
      %p151 = scmp.ne.s32.totalorder %s142, %s143
      %p152 = scmp.eq.s32.totalorder %s22, 0
      %p153 = por %p151, %p152
      %p154 = scmp.ne.s32.totalorder %s142, %s143
      %p155 = scmp.eq.s32.totalorder %s23, 1
      %p156 = por %p154, %p155
      %p158 = scmp.ne.s32.totalorder %s143, %s157
      %p159 = scmp.eq.s32.totalorder %s23, 0
      %p160 = por %p158, %p159
      %s162 = sadd.s32 %s161, 1
      %p165 = scmp.eq.s32.totalorder %s17, 1
      %p166 = scmp.ne.s32.totalorder %s161, %s163
      %p167 = scmp.eq.s32.totalorder %s17, 0
      %p168 = por %p166, %p167
      %p169 = scmp.ne.s32.totalorder %s161, %s163
      %p170 = scmp.eq.s32.totalorder %s22, 1
      %p171 = por %p169, %p170
      %p172 = scmp.ne.s32.totalorder %s163, %s164
      %p173 = scmp.eq.s32.totalorder %s22, 0
      %p174 = por %p172, %p173
      %p175 = scmp.ne.s32.totalorder %s163, %s164
      %p176 = scmp.eq.s32.totalorder %s23, 1
      %p177 = por %p175, %p176
      %p179 = scmp.ne.s32.totalorder %s164, %s178
      %p180 = scmp.eq.s32.totalorder %s23, 0
      %p181 = por %p179, %p180
      %s182 = ssub.s32 %s17, %s24
      %p183 = scmp.eq.s32.totalorder %s182, 0
      %s185 = sadd.s32 %s184, 1
      %s186 = scalar_select %p183, %s184, %s185
      %p189 = pneg %p183
      %p190 = scmp.eq.s32.totalorder %s17, 1
      %p191 = por %p189, %p190
      %p192 = scmp.ne.s32.totalorder %s184, %s187
      %p193 = scmp.eq.s32.totalorder %s17, 0
      %p194 = por %p192, %p193
      %p195 = scmp.ne.s32.totalorder %s184, %s187
      %p196 = scmp.eq.s32.totalorder %s22, 1
      %p197 = por %p195, %p196
      %p198 = scmp.ne.s32.totalorder %s187, %s188
      %p199 = scmp.eq.s32.totalorder %s22, 0
      %p200 = por %p198, %p199
      %p201 = scmp.ne.s32.totalorder %s187, %s188
      %p202 = scmp.eq.s32.totalorder %s23, 1
      %p203 = por %p201, %p202
      %p205 = scmp.ne.s32.totalorder %s188, %s204
      %p206 = scmp.eq.s32.totalorder %s23, 0
      %p207 = por %p205, %p206
      %p208 = scmp.le.s32.totalorder 1, %s17
      %p209 = scmp.lt.s32.totalorder %s17, 3
      %p210 = pnand %p208, %p209
      %p211 = pneg %p210
      // Predicated region
      $region9: #{tpu_custom_call.1} parent=5 // pred_check
        _
      $region10: #{tpu_custom_call.1} parent=5 // pred_check_branch
        %213 = sbr.rel (%p210) target = $region12
      $region11: #{tpu_custom_call.1} parent=5 // pred_region
        %s214 = ssub.s32 %s17, 1
        // Predicated region
        $region13: #{tpu_custom_call.1} parent=11 // pred_check
          %p215 = pneg %p90
        $region14: #{tpu_custom_call.1} parent=11 // pred_check_branch
          %217 = sbr.rel (%p215) target = $region16
        $region15: #{tpu_custom_call.1} parent=11 // pred_region
          _
        $region16: #{tpu_custom_call.1} parent=11 // pred_fallthru
          _
        // Predicated region
        $region17: #{tpu_custom_call.1} parent=11 // pred_check
          %p218 = pneg %p111
        $region18: #{tpu_custom_call.1} parent=11 // pred_check_branch
          %220 = sbr.rel (%p218) target = $region20
        $region19: #{tpu_custom_call.1} parent=11 // pred_region
          _
        $region20: #{tpu_custom_call.1} parent=11 // pred_fallthru
          _
        // Predicated region
        $region21: #{tpu_custom_call.1} parent=11 // pred_check
          %p221 = pneg %p132
        $region22: #{tpu_custom_call.1} parent=11 // pred_check_branch
          %223 = sbr.rel (%p221) target = $region24
        $region23: #{tpu_custom_call.1} parent=11 // pred_region
          _
        $region24: #{tpu_custom_call.1} parent=11 // pred_fallthru
          _
        // Predicated region
        $region25: #{tpu_custom_call.1} parent=11 // pred_check
          %p224 = pneg %p153
        $region26: #{tpu_custom_call.1} parent=11 // pred_check_branch
          %226 = sbr.rel (%p224) target = $region28
        $region27: #{tpu_custom_call.1} parent=11 // pred_region
          _
        $region28: #{tpu_custom_call.1} parent=11 // pred_fallthru
          _
        // Predicated region
        $region29: #{tpu_custom_call.1} parent=11 // pred_check
          %p227 = pneg %p174
        $region30: #{tpu_custom_call.1} parent=11 // pred_check_branch
          %229 = sbr.rel (%p227) target = $region32
        $region31: #{tpu_custom_call.1} parent=11 // pred_region
          _
        $region32: #{tpu_custom_call.1} parent=11 // pred_fallthru
          _
      $region12: #{tpu_custom_call.1} parent=5 // pred_fallthru
        _
      %p230 = scmp.lt.s32.totalorder %s17, 2
      // Predicated region
      $region33: #{tpu_custom_call.1} parent=5 // pred_check
        %p231 = pneg %p230
      $region34: #{tpu_custom_call.1} parent=5 // pred_check_branch
        %233 = sbr.rel (%p231) target = $region36
      $region35: #{tpu_custom_call.1} parent=5 // pred_region
        // Predicated region
        $region37: #{tpu_custom_call.1} parent=35 // pred_check
          %p234 = pneg %p37
        $region38: #{tpu_custom_call.1} parent=35 // pred_check_branch
          %236 = sbr.rel (%p234) target = $region40
        $region39: #{tpu_custom_call.1} parent=35 // pred_region
          %s237 = smul.u32 32, %s17
          %p238 = scmp.lt.s32.totalorder %s237, 63
          %s239 = scalar_select %p238, %s237, 63
          %s240 = smul.addr %s239, 8
          %s241 = scalar_lea.vmem %s0, %s240
          %s242 = smul.u32 32, %s17
        $region40: #{tpu_custom_call.1} parent=35 // pred_fallthru
          _
        // Predicated region
        $region41: #{tpu_custom_call.1} parent=35 // pred_check
          %p243 = pneg %p63
        $region42: #{tpu_custom_call.1} parent=35 // pred_check_branch
          %245 = sbr.rel (%p243) target = $region44
        $region43: #{tpu_custom_call.1} parent=35 // pred_region
          %s246 = smul.u32 32, %s17
          %p247 = scmp.lt.s32.totalorder %s246, 63
          %s248 = scalar_select %p247, %s246, 63
          %s249 = smul.addr %s248, 8
          %s250 = scalar_lea.vmem %s1, %s249
          %s251 = smul.u32 32, %s17
        $region44: #{tpu_custom_call.1} parent=35 // pred_fallthru
          _
      $region36: #{tpu_custom_call.1} parent=5 // pred_fallthru
        _
      %p252 = scmp.le.s32.totalorder 1, %s17
      %p253 = scmp.lt.s32.totalorder %s17, 3
      %p254 = pnand %p252, %p253
      %p255 = pneg %p254
      // Predicated region
      $region45: #{tpu_custom_call.1} parent=5 // pred_check
        _
      $region46: #{tpu_custom_call.1} parent=5 // pred_check_branch
        %257 = sbr.rel (%p254) target = $region48
      $region47: #{tpu_custom_call.1} parent=5 // pred_region
        %s258 = ssub.s32 %s17, 1
        %s259 = smul.u32 32, %s22
        %p260 = scmp.lt.s32.totalorder %s259, 63
        %s261 = scalar_select %p260, %s259, 63
        %s262 = smul.addr %s261, 8
        %s263 = scalar_lea.vmem %s0, %s262
        %p264 = pneg %p43
        %p265 = pneg %p40
        %s266 = smul.u32 32, %s22
        %p267 = scmp.lt.s32.totalorder %s266, 63
        %s268 = scalar_select %p267, %s266, 63
        %s269 = smul.addr %s268, 8
        %s270 = scalar_lea.vmem %s1, %s269
        %p271 = pneg %p69
        %p272 = pneg %p66
        %p273 = pneg %p90
        %p274 = pneg %p87
        %p275 = pneg %p111
        %p276 = pneg %p108
        %p277 = pneg %p132
        %p278 = pneg %p129
        %p279 = pneg %p153
        %p280 = pneg %p150
        %p281 = pneg %p174
        %p282 = pneg %p171
        %p283 = pneg %p200
        %p284 = pneg %p197
        %s285 = sand.u32 %s187, 1
        %s286 = scalar_lea.sflag [#allocation4], %s285
        %s287 = sand.u32 %s187, 1
        %s288 = smul.addr %s287, 2
        %s289 = scalar_lea.vmem [#allocation3], %s288
        %s290 = smul.u32 32, %s22
        %p291 = scmp.lt.s32.totalorder %s290, 63
        %s292 = scalar_select %p291, %s290, 63
        %s293 = smul.addr %s292, 8
        %s294 = scalar_lea.vmem %s0, %s293
        %s295 = smul.u32 32, %s22
        %s296 = smul.u32 32, %s22
        %p297 = scmp.lt.s32.totalorder %s296, 63
        %s298 = scalar_select %p297, %s296, 63
        %s299 = smul.addr %s298, 8
        %s300 = scalar_lea.vmem %s1, %s299
        %s301 = smul.u32 32, %s22
        %s302 = smul.u32 2, %s22
        %v304 = vld [vmem:[%s294] sm:$0xff]
        %v305 = vld [vmem:[%s294 + $0x8] sm:$0xff]
        %v306 = vld [vmem:[%s294 + $0x10] sm:$0xff]
        %v307 = vld [vmem:[%s294 + $0x18] sm:$0xff]
        %v308 = vld [vmem:[%s294 + $0x20] sm:$0xff]
        %v309 = vld [vmem:[%s294 + $0x28] sm:$0xff]
        %v310 = vld [vmem:[%s294 + $0x30] sm:$0xff]
        %v311 = vld [vmem:[%s294 + $0x38] sm:$0xff]
        %v312 = vld [vmem:[%s294 + $0x40] sm:$0xff]
        %v313 = vld [vmem:[%s294 + $0x48] sm:$0xff]
        %v314 = vld [vmem:[%s294 + $0x50] sm:$0xff]
        %v315 = vld [vmem:[%s294 + $0x58] sm:$0xff]
        %v316 = vld [vmem:[%s294 + $0x60] sm:$0xff]
        %v317 = vld [vmem:[%s294 + $0x68] sm:$0xff]
        %v318 = vld [vmem:[%s294 + $0x70] sm:$0xff]
        %v319 = vld [vmem:[%s294 + $0x78] sm:$0xff]
        %v320 = vld [vmem:[%s294 + $0x80] sm:$0xff]
        %v321 = vld [vmem:[%s294 + $0x88] sm:$0xff]
        %v322 = vld [vmem:[%s294 + $0x90] sm:$0xff]
        %v323 = vld [vmem:[%s294 + $0x98] sm:$0xff]
        %v324 = vld [vmem:[%s294 + $0xa0] sm:$0xff]
        %v325 = vld [vmem:[%s294 + $0xa8] sm:$0xff]
        %v326 = vld [vmem:[%s294 + $0xb0] sm:$0xff]
        %v327 = vld [vmem:[%s294 + $0xb8] sm:$0xff]
        %v328 = vld [vmem:[%s294 + $0xc0] sm:$0xff]
        %v329 = vld [vmem:[%s294 + $0xc8] sm:$0xff]
        %v330 = vld [vmem:[%s294 + $0xd0] sm:$0xff]
        %v331 = vld [vmem:[%s294 + $0xd8] sm:$0xff]
        %v332 = vld [vmem:[%s294 + $0xe0] sm:$0xff]
        %v333 = vld [vmem:[%s294 + $0xe8] sm:$0xff]
        %v334 = vld [vmem:[%s294 + $0xf0] sm:$0xff]
        %v335 = vld [vmem:[%s294 + $0xf8] sm:$0xff]
        %v336 = vld [vmem:[%s300] sm:$0xff]
        %v337 = vld [vmem:[%s300 + $0x8] sm:$0xff]
        %v338 = vld [vmem:[%s300 + $0x10] sm:$0xff]
        %v339 = vld [vmem:[%s300 + $0x18] sm:$0xff]
        %v340 = vld [vmem:[%s300 + $0x20] sm:$0xff]
        %v341 = vld [vmem:[%s300 + $0x28] sm:$0xff]
        %v342 = vld [vmem:[%s300 + $0x30] sm:$0xff]
        %v343 = vld [vmem:[%s300 + $0x38] sm:$0xff]
        %v344 = vld [vmem:[%s300 + $0x40] sm:$0xff]
        %v345 = vld [vmem:[%s300 + $0x48] sm:$0xff]
        %v346 = vld [vmem:[%s300 + $0x50] sm:$0xff]
        %v347 = vld [vmem:[%s300 + $0x58] sm:$0xff]
        %v348 = vld [vmem:[%s300 + $0x60] sm:$0xff]
        %v349 = vld [vmem:[%s300 + $0x68] sm:$0xff]
        %v350 = vld [vmem:[%s300 + $0x70] sm:$0xff]
        %v351 = vld [vmem:[%s300 + $0x78] sm:$0xff]
        %v352 = vld [vmem:[%s300 + $0x80] sm:$0xff]
        %v353 = vld [vmem:[%s300 + $0x88] sm:$0xff]
        %v354 = vld [vmem:[%s300 + $0x90] sm:$0xff]
        %v355 = vld [vmem:[%s300 + $0x98] sm:$0xff]
        %v356 = vld [vmem:[%s300 + $0xa0] sm:$0xff]
        %v357 = vld [vmem:[%s300 + $0xa8] sm:$0xff]
        %v358 = vld [vmem:[%s300 + $0xb0] sm:$0xff]
        %v359 = vld [vmem:[%s300 + $0xb8] sm:$0xff]
        %v360 = vld [vmem:[%s300 + $0xc0] sm:$0xff]
        %v361 = vld [vmem:[%s300 + $0xc8] sm:$0xff]
        %v362 = vld [vmem:[%s300 + $0xd0] sm:$0xff]
        %v363 = vld [vmem:[%s300 + $0xd8] sm:$0xff]
        %v364 = vld [vmem:[%s300 + $0xe0] sm:$0xff]
        %v365 = vld [vmem:[%s300 + $0xe8] sm:$0xff]
        %v366 = vld [vmem:[%s300 + $0xf0] sm:$0xff]
        %v367 = vld [vmem:[%s300 + $0xf8] sm:$0xff]
        %v368 = vlaneseq
        %v369 = vand.u32 %v368, 127
        %370 = vset.pattern.permute.xlu0 0
        %371 = vperm.xlu0 %370, %v304
        %v372 = vpop.permute.xlu0 %371
        %373 = vset.pattern.permute.xlu0 0
        %374 = vperm.xlu0 %373, %v305
        %v375 = vpop.permute.xlu0 %374
        %376 = vset.pattern.permute.xlu0 0
        %377 = vperm.xlu0 %376, %v306
        %v378 = vpop.permute.xlu0 %377
        %379 = vset.pattern.permute.xlu0 0
        %380 = vperm.xlu0 %379, %v307
        %v381 = vpop.permute.xlu0 %380
        %382 = vset.pattern.permute.xlu0 0
        %383 = vperm.xlu0 %382, %v308
        %v384 = vpop.permute.xlu0 %383
        %385 = vset.pattern.permute.xlu0 0
        %386 = vperm.xlu0 %385, %v309
        %v387 = vpop.permute.xlu0 %386
        %388 = vset.pattern.permute.xlu0 0
        %389 = vperm.xlu0 %388, %v310
        %v390 = vpop.permute.xlu0 %389
        %391 = vset.pattern.permute.xlu0 0
        %392 = vperm.xlu0 %391, %v311
        %v393 = vpop.permute.xlu0 %392
        %394 = vset.pattern.permute.xlu0 0
        %395 = vperm.xlu0 %394, %v312
        %v396 = vpop.permute.xlu0 %395
        %397 = vset.pattern.permute.xlu0 0
        %398 = vperm.xlu0 %397, %v313
        %v399 = vpop.permute.xlu0 %398
        %400 = vset.pattern.permute.xlu0 0
        %401 = vperm.xlu0 %400, %v314
        %v402 = vpop.permute.xlu0 %401
        %403 = vset.pattern.permute.xlu0 0
        %404 = vperm.xlu0 %403, %v315
        %v405 = vpop.permute.xlu0 %404
        %406 = vset.pattern.permute.xlu0 0
        %407 = vperm.xlu0 %406, %v316
        %v408 = vpop.permute.xlu0 %407
        %409 = vset.pattern.permute.xlu0 0
        %410 = vperm.xlu0 %409, %v317
        %v411 = vpop.permute.xlu0 %410
        %412 = vset.pattern.permute.xlu0 0
        %413 = vperm.xlu0 %412, %v318
        %v414 = vpop.permute.xlu0 %413
        %415 = vset.pattern.permute.xlu0 0
        %416 = vperm.xlu0 %415, %v319
        %v417 = vpop.permute.xlu0 %416
        %418 = vset.pattern.permute.xlu0 0
        %419 = vperm.xlu0 %418, %v320
        %v420 = vpop.permute.xlu0 %419
        %421 = vset.pattern.permute.xlu0 0
        %422 = vperm.xlu0 %421, %v321
        %v423 = vpop.permute.xlu0 %422
        %424 = vset.pattern.permute.xlu0 0
        %425 = vperm.xlu0 %424, %v322
        %v426 = vpop.permute.xlu0 %425
        %427 = vset.pattern.permute.xlu0 0
        %428 = vperm.xlu0 %427, %v323
        %v429 = vpop.permute.xlu0 %428
        %430 = vset.pattern.permute.xlu0 0
        %431 = vperm.xlu0 %430, %v324
        %v432 = vpop.permute.xlu0 %431
        %433 = vset.pattern.permute.xlu0 0
        %434 = vperm.xlu0 %433, %v325
        %v435 = vpop.permute.xlu0 %434
        %436 = vset.pattern.permute.xlu0 0
        %437 = vperm.xlu0 %436, %v326
        %v438 = vpop.permute.xlu0 %437
        %439 = vset.pattern.permute.xlu0 0
        %440 = vperm.xlu0 %439, %v327
        %v441 = vpop.permute.xlu0 %440
        %442 = vset.pattern.permute.xlu0 0
        %443 = vperm.xlu0 %442, %v328
        %v444 = vpop.permute.xlu0 %443
        %445 = vset.pattern.permute.xlu0 0
        %446 = vperm.xlu0 %445, %v329
        %v447 = vpop.permute.xlu0 %446
        %448 = vset.pattern.permute.xlu0 0
        %449 = vperm.xlu0 %448, %v330
        %v450 = vpop.permute.xlu0 %449
        %451 = vset.pattern.permute.xlu0 0
        %452 = vperm.xlu0 %451, %v331
        %v453 = vpop.permute.xlu0 %452
        %454 = vset.pattern.permute.xlu0 0
        %455 = vperm.xlu0 %454, %v332
        %v456 = vpop.permute.xlu0 %455
        %457 = vset.pattern.permute.xlu0 0
        %458 = vperm.xlu0 %457, %v333
        %v459 = vpop.permute.xlu0 %458
        %460 = vset.pattern.permute.xlu0 0
        %461 = vperm.xlu0 %460, %v334
        %v462 = vpop.permute.xlu0 %461
        %463 = vset.pattern.permute.xlu0 0
        %464 = vperm.xlu0 %463, %v335
        %v465 = vpop.permute.xlu0 %464
        %vm466 = vcmp.eq.s32.totalorder %v372, %v369
        %vm467 = vcmp.eq.s32.totalorder %v375, %v369
        %vm468 = vcmp.eq.s32.totalorder %v378, %v369
        %vm469 = vcmp.eq.s32.totalorder %v381, %v369
        %vm470 = vcmp.eq.s32.totalorder %v384, %v369
        %vm471 = vcmp.eq.s32.totalorder %v387, %v369
        %vm472 = vcmp.eq.s32.totalorder %v390, %v369
        %vm473 = vcmp.eq.s32.totalorder %v393, %v369
        %vm474 = vcmp.eq.s32.totalorder %v396, %v369
        %vm475 = vcmp.eq.s32.totalorder %v399, %v369
        %vm476 = vcmp.eq.s32.totalorder %v402, %v369
        %vm477 = vcmp.eq.s32.totalorder %v405, %v369
        %vm478 = vcmp.eq.s32.totalorder %v408, %v369
        %vm479 = vcmp.eq.s32.totalorder %v411, %v369
        %vm480 = vcmp.eq.s32.totalorder %v414, %v369
        %vm481 = vcmp.eq.s32.totalorder %v417, %v369
        %vm482 = vcmp.eq.s32.totalorder %v420, %v369
        %vm483 = vcmp.eq.s32.totalorder %v423, %v369
        %vm484 = vcmp.eq.s32.totalorder %v426, %v369
        %vm485 = vcmp.eq.s32.totalorder %v429, %v369
        %vm486 = vcmp.eq.s32.totalorder %v432, %v369
        %vm487 = vcmp.eq.s32.totalorder %v435, %v369
        %vm488 = vcmp.eq.s32.totalorder %v438, %v369
        %vm489 = vcmp.eq.s32.totalorder %v441, %v369
        %vm490 = vcmp.eq.s32.totalorder %v444, %v369
        %vm491 = vcmp.eq.s32.totalorder %v447, %v369
        %vm492 = vcmp.eq.s32.totalorder %v450, %v369
        %vm493 = vcmp.eq.s32.totalorder %v453, %v369
        %vm494 = vcmp.eq.s32.totalorder %v456, %v369
        %vm495 = vcmp.eq.s32.totalorder %v459, %v369
        %vm496 = vcmp.eq.s32.totalorder %v462, %v369
        %vm497 = vcmp.eq.s32.totalorder %v465, %v369
        %v498 = vsel %vm466, 1.0, 0.0
        %v499 = vsel %vm467, 1.0, 0.0
        %v500 = vsel %vm468, 1.0, 0.0
        %v501 = vsel %vm469, 1.0, 0.0
        %v502 = vsel %vm470, 1.0, 0.0
        %v503 = vsel %vm471, 1.0, 0.0
        %v504 = vsel %vm472, 1.0, 0.0
        %v505 = vsel %vm473, 1.0, 0.0
        %v506 = vsel %vm474, 1.0, 0.0
        %v507 = vsel %vm475, 1.0, 0.0
        %v508 = vsel %vm476, 1.0, 0.0
        %v509 = vsel %vm477, 1.0, 0.0
        %v510 = vsel %vm478, 1.0, 0.0
        %v511 = vsel %vm479, 1.0, 0.0
        %v512 = vsel %vm480, 1.0, 0.0
        %v513 = vsel %vm481, 1.0, 0.0
        %v514 = vsel %vm482, 1.0, 0.0
        %v515 = vsel %vm483, 1.0, 0.0
        %v516 = vsel %vm484, 1.0, 0.0
        %v517 = vsel %vm485, 1.0, 0.0
        %v518 = vsel %vm486, 1.0, 0.0
        %v519 = vsel %vm487, 1.0, 0.0
        %v520 = vsel %vm488, 1.0, 0.0
        %v521 = vsel %vm489, 1.0, 0.0
        %v522 = vsel %vm490, 1.0, 0.0
        %v523 = vsel %vm491, 1.0, 0.0
        %v524 = vsel %vm492, 1.0, 0.0
        %v525 = vsel %vm493, 1.0, 0.0
        %v526 = vsel %vm494, 1.0, 0.0
        %v527 = vsel %vm495, 1.0, 0.0
        %v528 = vsel %vm496, 1.0, 0.0
        %v529 = vsel %vm497, 1.0, 0.0
        %v530 = vpack.c.bf16 %v499, %v498
        %v531 = vpack.c.bf16 %v501, %v500
        %v532 = vpack.c.bf16 %v503, %v502
        %v533 = vpack.c.bf16 %v505, %v504
        %v534 = vpack.c.bf16 %v507, %v506
        %v535 = vpack.c.bf16 %v509, %v508
        %v536 = vpack.c.bf16 %v511, %v510
        %v537 = vpack.c.bf16 %v513, %v512
        %v538 = vpack.c.bf16 %v515, %v514
        %v539 = vpack.c.bf16 %v517, %v516
        %v540 = vpack.c.bf16 %v519, %v518
        %v541 = vpack.c.bf16 %v521, %v520
        %v542 = vpack.c.bf16 %v523, %v522
        %v543 = vpack.c.bf16 %v525, %v524
        %v544 = vpack.c.bf16 %v527, %v526
        %v545 = vpack.c.bf16 %v529, %v528
        %546 = vset.pattern.permute.xlu0 0
        %547 = vperm.xlu0 %546, %v336
        %v548 = vpop.permute.xlu0 %547
        %549 = vset.pattern.permute.xlu0 0
        %550 = vperm.xlu0 %549, %v337
        %v551 = vpop.permute.xlu0 %550
        %552 = vset.pattern.permute.xlu0 0
        %553 = vperm.xlu0 %552, %v338
        %v554 = vpop.permute.xlu0 %553
        %555 = vset.pattern.permute.xlu0 0
        %556 = vperm.xlu0 %555, %v339
        %v557 = vpop.permute.xlu0 %556
        %558 = vset.pattern.permute.xlu0 0
        %559 = vperm.xlu0 %558, %v340
        %v560 = vpop.permute.xlu0 %559
        %561 = vset.pattern.permute.xlu0 0
        %562 = vperm.xlu0 %561, %v341
        %v563 = vpop.permute.xlu0 %562
        %564 = vset.pattern.permute.xlu0 0
        %565 = vperm.xlu0 %564, %v342
        %v566 = vpop.permute.xlu0 %565
        %567 = vset.pattern.permute.xlu0 0
        %568 = vperm.xlu0 %567, %v343
        %v569 = vpop.permute.xlu0 %568
        %570 = vset.pattern.permute.xlu0 0
        %571 = vperm.xlu0 %570, %v344
        %v572 = vpop.permute.xlu0 %571
        %573 = vset.pattern.permute.xlu0 0
        %574 = vperm.xlu0 %573, %v345
        %v575 = vpop.permute.xlu0 %574
        %576 = vset.pattern.permute.xlu0 0
        %577 = vperm.xlu0 %576, %v346
        %v578 = vpop.permute.xlu0 %577
        %579 = vset.pattern.permute.xlu0 0
        %580 = vperm.xlu0 %579, %v347
        %v581 = vpop.permute.xlu0 %580
        %582 = vset.pattern.permute.xlu0 0
        %583 = vperm.xlu0 %582, %v348
        %v584 = vpop.permute.xlu0 %583
        %585 = vset.pattern.permute.xlu0 0
        %586 = vperm.xlu0 %585, %v349
        %v587 = vpop.permute.xlu0 %586
        %588 = vset.pattern.permute.xlu0 0
        %589 = vperm.xlu0 %588, %v350
        %v590 = vpop.permute.xlu0 %589
        %591 = vset.pattern.permute.xlu0 0
        %592 = vperm.xlu0 %591, %v351
        %v593 = vpop.permute.xlu0 %592
        %594 = vset.pattern.permute.xlu0 0
        %595 = vperm.xlu0 %594, %v352
        %v596 = vpop.permute.xlu0 %595
        %597 = vset.pattern.permute.xlu0 0
        %598 = vperm.xlu0 %597, %v353
        %v599 = vpop.permute.xlu0 %598
        %600 = vset.pattern.permute.xlu0 0
        %601 = vperm.xlu0 %600, %v354
        %v602 = vpop.permute.xlu0 %601
        %603 = vset.pattern.permute.xlu0 0
        %604 = vperm.xlu0 %603, %v355
        %v605 = vpop.permute.xlu0 %604
        %606 = vset.pattern.permute.xlu0 0
        %607 = vperm.xlu0 %606, %v356
        %v608 = vpop.permute.xlu0 %607
        %609 = vset.pattern.permute.xlu0 0
        %610 = vperm.xlu0 %609, %v357
        %v611 = vpop.permute.xlu0 %610
        %612 = vset.pattern.permute.xlu0 0
        %613 = vperm.xlu0 %612, %v358
        %v614 = vpop.permute.xlu0 %613
        %615 = vset.pattern.permute.xlu0 0
        %616 = vperm.xlu0 %615, %v359
        %v617 = vpop.permute.xlu0 %616
        %618 = vset.pattern.permute.xlu0 0
        %619 = vperm.xlu0 %618, %v360
        %v620 = vpop.permute.xlu0 %619
        %621 = vset.pattern.permute.xlu0 0
        %622 = vperm.xlu0 %621, %v361
        %v623 = vpop.permute.xlu0 %622
        %624 = vset.pattern.permute.xlu0 0
        %625 = vperm.xlu0 %624, %v362
        %v626 = vpop.permute.xlu0 %625
        %627 = vset.pattern.permute.xlu0 0
        %628 = vperm.xlu0 %627, %v363
        %v629 = vpop.permute.xlu0 %628
        %630 = vset.pattern.permute.xlu0 0
        %631 = vperm.xlu0 %630, %v364
        %v632 = vpop.permute.xlu0 %631
        %633 = vset.pattern.permute.xlu0 0
        %634 = vperm.xlu0 %633, %v365
        %v635 = vpop.permute.xlu0 %634
        %636 = vset.pattern.permute.xlu0 0
        %637 = vperm.xlu0 %636, %v366
        %v638 = vpop.permute.xlu0 %637
        %639 = vset.pattern.permute.xlu0 0
        %640 = vperm.xlu0 %639, %v367
        %v641 = vpop.permute.xlu0 %640
        %vm642 = vcmp.eq.s32.totalorder %v548, %v369
        %vm643 = vcmp.eq.s32.totalorder %v551, %v369
        %vm644 = vcmp.eq.s32.totalorder %v554, %v369
        %vm645 = vcmp.eq.s32.totalorder %v557, %v369
        %vm646 = vcmp.eq.s32.totalorder %v560, %v369
        %vm647 = vcmp.eq.s32.totalorder %v563, %v369
        %vm648 = vcmp.eq.s32.totalorder %v566, %v369
        %vm649 = vcmp.eq.s32.totalorder %v569, %v369
        %vm650 = vcmp.eq.s32.totalorder %v572, %v369
        %vm651 = vcmp.eq.s32.totalorder %v575, %v369
        %vm652 = vcmp.eq.s32.totalorder %v578, %v369
        %vm653 = vcmp.eq.s32.totalorder %v581, %v369
        %vm654 = vcmp.eq.s32.totalorder %v584, %v369
        %vm655 = vcmp.eq.s32.totalorder %v587, %v369
        %vm656 = vcmp.eq.s32.totalorder %v590, %v369
        %vm657 = vcmp.eq.s32.totalorder %v593, %v369
        %vm658 = vcmp.eq.s32.totalorder %v596, %v369
        %vm659 = vcmp.eq.s32.totalorder %v599, %v369
        %vm660 = vcmp.eq.s32.totalorder %v602, %v369
        %vm661 = vcmp.eq.s32.totalorder %v605, %v369
        %vm662 = vcmp.eq.s32.totalorder %v608, %v369
        %vm663 = vcmp.eq.s32.totalorder %v611, %v369
        %vm664 = vcmp.eq.s32.totalorder %v614, %v369
        %vm665 = vcmp.eq.s32.totalorder %v617, %v369
        %vm666 = vcmp.eq.s32.totalorder %v620, %v369
        %vm667 = vcmp.eq.s32.totalorder %v623, %v369
        %vm668 = vcmp.eq.s32.totalorder %v626, %v369
        %vm669 = vcmp.eq.s32.totalorder %v629, %v369
        %vm670 = vcmp.eq.s32.totalorder %v632, %v369
        %vm671 = vcmp.eq.s32.totalorder %v635, %v369
        %vm672 = vcmp.eq.s32.totalorder %v638, %v369
        %vm673 = vcmp.eq.s32.totalorder %v641, %v369
        %v674 = vsel %vm642, 1.0, 0.0
        %v675 = vsel %vm643, 1.0, 0.0
        %v676 = vsel %vm644, 1.0, 0.0
        %v677 = vsel %vm645, 1.0, 0.0
        %v678 = vsel %vm646, 1.0, 0.0
        %v679 = vsel %vm647, 1.0, 0.0
        %v680 = vsel %vm648, 1.0, 0.0
        %v681 = vsel %vm649, 1.0, 0.0
        %v682 = vsel %vm650, 1.0, 0.0
        %v683 = vsel %vm651, 1.0, 0.0
        %v684 = vsel %vm652, 1.0, 0.0
        %v685 = vsel %vm653, 1.0, 0.0
        %v686 = vsel %vm654, 1.0, 0.0
        %v687 = vsel %vm655, 1.0, 0.0
        %v688 = vsel %vm656, 1.0, 0.0
        %v689 = vsel %vm657, 1.0, 0.0
        %v690 = vsel %vm658, 1.0, 0.0
        %v691 = vsel %vm659, 1.0, 0.0
        %v692 = vsel %vm660, 1.0, 0.0
        %v693 = vsel %vm661, 1.0, 0.0
        %v694 = vsel %vm662, 1.0, 0.0
        %v695 = vsel %vm663, 1.0, 0.0
        %v696 = vsel %vm664, 1.0, 0.0
        %v697 = vsel %vm665, 1.0, 0.0
        %v698 = vsel %vm666, 1.0, 0.0
        %v699 = vsel %vm667, 1.0, 0.0
        %v700 = vsel %vm668, 1.0, 0.0
        %v701 = vsel %vm669, 1.0, 0.0
        %v702 = vsel %vm670, 1.0, 0.0
        %v703 = vsel %vm671, 1.0, 0.0
        %v704 = vsel %vm672, 1.0, 0.0
        %v705 = vsel %vm673, 1.0, 0.0
        %v706 = vpack.c.bf16 %v675, %v674
        %v707 = vpack.c.bf16 %v677, %v676
        %v708 = vpack.c.bf16 %v679, %v678
        %v709 = vpack.c.bf16 %v681, %v680
        %v710 = vpack.c.bf16 %v683, %v682
        %v711 = vpack.c.bf16 %v685, %v684
        %v712 = vpack.c.bf16 %v687, %v686
        %v713 = vpack.c.bf16 %v689, %v688
        %v714 = vpack.c.bf16 %v691, %v690
        %v715 = vpack.c.bf16 %v693, %v692
        %v716 = vpack.c.bf16 %v695, %v694
        %v717 = vpack.c.bf16 %v697, %v696
        %v718 = vpack.c.bf16 %v699, %v698
        %v719 = vpack.c.bf16 %v701, %v700
        %v720 = vpack.c.bf16 %v703, %v702
        %v721 = vpack.c.bf16 %v705, %v704
        %v722 = vld [vmem:[%s2] sm:$0xf]
        %v723 = vld [vmem:[%s2 + $0x4] sm:$0xf]
        %v724 = vld [vmem:[%s2 + $0x8] sm:$0xf]
        %v725 = vld [vmem:[%s2 + $0xc] sm:$0xf]
        %v726 = vld [vmem:[%s2 + $0x10] sm:$0xf]
        %v727 = vld [vmem:[%s2 + $0x14] sm:$0xf]
        %v728 = vld [vmem:[%s2 + $0x18] sm:$0xf]
        %v729 = vld [vmem:[%s2 + $0x1c] sm:$0xf]
        %v730 = vld [vmem:[%s2 + $0x20] sm:$0xf]
        %v731 = vld [vmem:[%s2 + $0x24] sm:$0xf]
        %v732 = vld [vmem:[%s2 + $0x28] sm:$0xf]
        %v733 = vld [vmem:[%s2 + $0x2c] sm:$0xf]
        %v734 = vld [vmem:[%s2 + $0x30] sm:$0xf]
        %v735 = vld [vmem:[%s2 + $0x34] sm:$0xf]
        %v736 = vld [vmem:[%s2 + $0x38] sm:$0xf]
        %v737 = vld [vmem:[%s2 + $0x3c] sm:$0xf]
        %v738 = vld [vmem:[%s3] sm:$0xf]
        %v739 = vld [vmem:[%s3 + $0x4] sm:$0xf]
        %v740 = vld [vmem:[%s3 + $0x8] sm:$0xf]
        %v741 = vld [vmem:[%s3 + $0xc] sm:$0xf]
        %v742 = vld [vmem:[%s3 + $0x10] sm:$0xf]
        %v743 = vld [vmem:[%s3 + $0x14] sm:$0xf]
        %v744 = vld [vmem:[%s3 + $0x18] sm:$0xf]
        %v745 = vld [vmem:[%s3 + $0x1c] sm:$0xf]
        %v746 = vld [vmem:[%s3 + $0x20] sm:$0xf]
        %v747 = vld [vmem:[%s3 + $0x24] sm:$0xf]
        %v748 = vld [vmem:[%s3 + $0x28] sm:$0xf]
        %v749 = vld [vmem:[%s3 + $0x2c] sm:$0xf]
        %v750 = vld [vmem:[%s3 + $0x30] sm:$0xf]
        %v751 = vld [vmem:[%s3 + $0x34] sm:$0xf]
        %v752 = vld [vmem:[%s3 + $0x38] sm:$0xf]
        %v753 = vld [vmem:[%s3 + $0x3c] sm:$0xf]
        %v770 = vunpack.c.l.b16 %v738
        %v771 = vunpack.c.l.b16 %v739
        %v772 = vunpack.c.l.b16 %v740
        %v773 = vunpack.c.l.b16 %v741
        %v774 = vunpack.c.l.b16 %v742
        %v775 = vunpack.c.l.b16 %v743
        %v776 = vunpack.c.l.b16 %v744
        %v777 = vunpack.c.l.b16 %v745
        %v778 = vunpack.c.l.b16 %v746
        %v779 = vunpack.c.l.b16 %v747
        %v780 = vunpack.c.l.b16 %v748
        %v781 = vunpack.c.l.b16 %v749
        %v782 = vunpack.c.l.b16 %v750
        %v783 = vunpack.c.l.b16 %v751
        %v784 = vunpack.c.l.b16 %v752
        %v785 = vunpack.c.l.b16 %v753
        %v786 = vpack.c.b16 %v771, %v770
        %v787 = vpack.c.b16 %v773, %v772
        %v788 = vpack.c.b16 %v775, %v774
        %v789 = vpack.c.b16 %v777, %v776
        %v790 = vpack.c.b16 %v779, %v778
        %v791 = vpack.c.b16 %v781, %v780
        %v792 = vpack.c.b16 %v783, %v782
        %v793 = vpack.c.b16 %v785, %v784
        %802 = vmatprep.subr.bf16.mxu0 0
        %803 = vmatpush1.bf16.msra.mxu0 %v786
        %804 = vmatprep.subr.bf16.mxu0 0
        %805 = vmatpush1.bf16.msra.mxu0 %v787
        %806 = vmatprep.subr.bf16.mxu0 0
        %807 = vmatpush1.bf16.msra.mxu0 %v788
        %808 = vmatprep.subr.bf16.mxu0 0
        %809 = vmatpush1.bf16.msra.mxu0 %v789
        %810 = vmatprep.subr.bf16.mxu0 0
        %811 = vmatpush1.bf16.msra.mxu0 %v790
        %812 = vmatprep.subr.bf16.mxu0 0
        %813 = vmatpush1.bf16.msra.mxu0 %v791
        %814 = vmatprep.subr.bf16.mxu0 0
        %815 = vmatpush1.bf16.msra.mxu0 %v792
        %816 = vmatprep.subr.bf16.mxu0 0
        %817 = vmatpush1.bf16.msra.mxu0 %v793
        %818 = vmatprep.subr.bf16.mxu0 0
        %819 = vmatpush1.bf16.msra.mxu0 0
        %820 = vmatprep.subr.bf16.mxu0 0
        %821 = vmatpush1.bf16.msra.mxu0 0
        %822 = vmatprep.subr.bf16.mxu0 0
        %823 = vmatpush1.bf16.msra.mxu0 0
        %824 = vmatprep.subr.bf16.mxu0 0
        %825 = vmatpush1.bf16.msra.mxu0 0
        %826 = vmatprep.subr.bf16.mxu0 0
        %827 = vmatpush1.bf16.msra.mxu0 0
        %828 = vmatprep.subr.bf16.mxu0 0
        %829 = vmatpush1.bf16.msra.mxu0 0
        %830 = vmatprep.subr.bf16.mxu0 0
        %831 = vmatpush1.bf16.msra.mxu0 0
        %832 = vmatprep.subr.bf16.mxu0 0
        %833 = vmatpush1.bf16.msra.mxu0 0
        %834 = vmatprep.mubr.bf16.mxu0 0
        %835 = vmatmul.mubr.bf16.gmra.mrb[0].mxu0 %v706
        %v836 = vpop.f32.mrb[0].mxu0
        %v837 = vadd.f32 0.0, %v836
        %v838 = vpop.f32.mrb[0].mxu0
        %v839 = vpop.f32.mrb[0].mxu0
        %v840 = vadd.f32 0.0, %v839
        %v841 = vpop.f32.mrb[0].mxu0
        %842 = vmatprep.mubr.bf16.mxu0 0
        %843 = vmatmul.mubr.bf16.gmra.mrb[0].mxu0 %v707
        %v844 = vpop.f32.mrb[0].mxu0
        %v845 = vadd.f32 0.0, %v844
        %v846 = vpop.f32.mrb[0].mxu0
        %v847 = vpop.f32.mrb[0].mxu0
        %v848 = vadd.f32 0.0, %v847
        %v849 = vpop.f32.mrb[0].mxu0
        %850 = vmatprep.mubr.bf16.mxu0 0
        %851 = vmatmul.mubr.bf16.gmra.mrb[0].mxu0 %v708
        %v852 = vpop.f32.mrb[0].mxu0
        %v853 = vadd.f32 0.0, %v852
        %v854 = vpop.f32.mrb[0].mxu0
        %v855 = vpop.f32.mrb[0].mxu0
        %v856 = vadd.f32 0.0, %v855
        %v857 = vpop.f32.mrb[0].mxu0
        %858 = vmatprep.mubr.bf16.mxu0 0
        %859 = vmatmul.mubr.bf16.gmra.mrb[0].mxu0 %v709
        %v860 = vpop.f32.mrb[0].mxu0
        %v861 = vadd.f32 0.0, %v860
        %v862 = vpop.f32.mrb[0].mxu0
        %v863 = vpop.f32.mrb[0].mxu0
        %v864 = vadd.f32 0.0, %v863
        %v865 = vpop.f32.mrb[0].mxu0
        %866 = vmatprep.mubr.bf16.mxu0 0
        %867 = vmatmul.mubr.bf16.gmra.mrb[0].mxu0 %v710
        %v868 = vpop.f32.mrb[0].mxu0
        %v869 = vadd.f32 0.0, %v868
        %v870 = vpop.f32.mrb[0].mxu0
        %v871 = vpop.f32.mrb[0].mxu0
        %v872 = vadd.f32 0.0, %v871
        %v873 = vpop.f32.mrb[0].mxu0
        %874 = vmatprep.mubr.bf16.mxu0 0
        %875 = vmatmul.mubr.bf16.gmra.mrb[0].mxu0 %v711
        %v876 = vpop.f32.mrb[0].mxu0
        %v877 = vadd.f32 0.0, %v876
        %v878 = vpop.f32.mrb[0].mxu0
        %v879 = vpop.f32.mrb[0].mxu0
        %v880 = vadd.f32 0.0, %v879
        %v881 = vpop.f32.mrb[0].mxu0
        %882 = vmatprep.mubr.bf16.mxu0 0
        %883 = vmatmul.mubr.bf16.gmra.mrb[0].mxu0 %v712
        %v884 = vpop.f32.mrb[0].mxu0
        %v885 = vadd.f32 0.0, %v884
        %v886 = vpop.f32.mrb[0].mxu0
        %v887 = vpop.f32.mrb[0].mxu0
        %v888 = vadd.f32 0.0, %v887
        %v889 = vpop.f32.mrb[0].mxu0
        %890 = vmatprep.mubr.bf16.mxu0 0
        %891 = vmatmul.mubr.bf16.gmra.mrb[0].mxu0 %v713
        %v892 = vpop.f32.mrb[0].mxu0
        %v893 = vadd.f32 0.0, %v892
        %v894 = vpop.f32.mrb[0].mxu0
        %v895 = vpop.f32.mrb[0].mxu0
        %v896 = vadd.f32 0.0, %v895
        %v897 = vpop.f32.mrb[0].mxu0
        %898 = vmatprep.mubr.bf16.mxu0 0
        %899 = vmatmul.mubr.bf16.gmra.mrb[0].mxu0 %v714
        %v900 = vpop.f32.mrb[0].mxu0
        %v901 = vadd.f32 0.0, %v900
        %v902 = vpop.f32.mrb[0].mxu0
        %v903 = vpop.f32.mrb[0].mxu0
        %v904 = vadd.f32 0.0, %v903
        %v905 = vpop.f32.mrb[0].mxu0
        %906 = vmatprep.mubr.bf16.mxu0 0
        %907 = vmatmul.mubr.bf16.gmra.mrb[0].mxu0 %v715
        %v908 = vpop.f32.mrb[0].mxu0
        %v909 = vadd.f32 0.0, %v908
        %v910 = vpop.f32.mrb[0].mxu0
        %v911 = vpop.f32.mrb[0].mxu0
        %v912 = vadd.f32 0.0, %v911
        %v913 = vpop.f32.mrb[0].mxu0
        %914 = vmatprep.mubr.bf16.mxu0 0
        %915 = vmatmul.mubr.bf16.gmra.mrb[0].mxu0 %v716
        %v916 = vpop.f32.mrb[0].mxu0
        %v917 = vadd.f32 0.0, %v916
        %v918 = vpop.f32.mrb[0].mxu0
        %v919 = vpop.f32.mrb[0].mxu0
        %v920 = vadd.f32 0.0, %v919
        %v921 = vpop.f32.mrb[0].mxu0
        %922 = vmatprep.mubr.bf16.mxu0 0
        %923 = vmatmul.mubr.bf16.gmra.mrb[0].mxu0 %v717
        %v924 = vpop.f32.mrb[0].mxu0
        %v925 = vadd.f32 0.0, %v924
        %v926 = vpop.f32.mrb[0].mxu0
        %v927 = vpop.f32.mrb[0].mxu0
        %v928 = vadd.f32 0.0, %v927
        %v929 = vpop.f32.mrb[0].mxu0
        %930 = vmatprep.mubr.bf16.mxu0 0
        %931 = vmatmul.mubr.bf16.gmra.mrb[0].mxu0 %v718
        %v932 = vpop.f32.mrb[0].mxu0
        %v933 = vadd.f32 0.0, %v932
        %v934 = vpop.f32.mrb[0].mxu0
        %v935 = vpop.f32.mrb[0].mxu0
        %v936 = vadd.f32 0.0, %v935
        %v937 = vpop.f32.mrb[0].mxu0
        %938 = vmatprep.mubr.bf16.mxu0 0
        %939 = vmatmul.mubr.bf16.gmra.mrb[0].mxu0 %v719
        %v940 = vpop.f32.mrb[0].mxu0
        %v941 = vadd.f32 0.0, %v940
        %v942 = vpop.f32.mrb[0].mxu0
        %v943 = vpop.f32.mrb[0].mxu0
        %v944 = vadd.f32 0.0, %v943
        %v945 = vpop.f32.mrb[0].mxu0
        %946 = vmatprep.mubr.bf16.mxu0 0
        %947 = vmatmul.mubr.bf16.gmra.mrb[0].mxu0 %v720
        %v948 = vpop.f32.mrb[0].mxu0
        %v949 = vadd.f32 0.0, %v948
        %v950 = vpop.f32.mrb[0].mxu0
        %v951 = vpop.f32.mrb[0].mxu0
        %v952 = vadd.f32 0.0, %v951
        %v953 = vpop.f32.mrb[0].mxu0
        %954 = vmatprep.mubr.bf16.mxu0 0
        %955 = vmatmul.mubr.bf16.gmra.mrb[0].mxu0 %v721
        %v956 = vpop.f32.mrb[0].mxu0
        %v957 = vadd.f32 0.0, %v956
        %v958 = vpop.f32.mrb[0].mxu0
        %v959 = vpop.f32.mrb[0].mxu0
        %v960 = vadd.f32 0.0, %v959
        %v961 = vpop.f32.mrb[0].mxu0
        %962 = vdwg.mxu0
        %v979 = vunpack.c.l.b16 %v722
        %v980 = vunpack.c.l.b16 %v723
        %v981 = vunpack.c.l.b16 %v724
        %v982 = vunpack.c.l.b16 %v725
        %v983 = vunpack.c.l.b16 %v726
        %v984 = vunpack.c.l.b16 %v727
        %v985 = vunpack.c.l.b16 %v728
        %v986 = vunpack.c.l.b16 %v729
        %v987 = vunpack.c.l.b16 %v730
        %v988 = vunpack.c.l.b16 %v731
        %v989 = vunpack.c.l.b16 %v732
        %v990 = vunpack.c.l.b16 %v733
        %v991 = vunpack.c.l.b16 %v734
        %v992 = vunpack.c.l.b16 %v735
        %v993 = vunpack.c.l.b16 %v736
        %v994 = vunpack.c.l.b16 %v737
        %v995 = vpack.c.b16 %v980, %v979
        %v996 = vpack.c.b16 %v982, %v981
        %v997 = vpack.c.b16 %v984, %v983
        %v998 = vpack.c.b16 %v986, %v985
        %v999 = vpack.c.b16 %v988, %v987
        %v1000 = vpack.c.b16 %v990, %v989
        %v1001 = vpack.c.b16 %v992, %v991
        %v1002 = vpack.c.b16 %v994, %v993
        %1011 = vmatprep.subr.bf16.mxu0 0
        %1012 = vmatpush1.bf16.msra.mxu0 %v995
        %1013 = vmatprep.subr.bf16.mxu0 0
        %1014 = vmatpush1.bf16.msra.mxu0 %v996
        %1015 = vmatprep.subr.bf16.mxu0 0
        %1016 = vmatpush1.bf16.msra.mxu0 %v997
        %1017 = vmatprep.subr.bf16.mxu0 0
        %1018 = vmatpush1.bf16.msra.mxu0 %v998
        %1019 = vmatprep.subr.bf16.mxu0 0
        %1020 = vmatpush1.bf16.msra.mxu0 %v999
        %1021 = vmatprep.subr.bf16.mxu0 0
        %1022 = vmatpush1.bf16.msra.mxu0 %v1000
        %1023 = vmatprep.subr.bf16.mxu0 0
        %1024 = vmatpush1.bf16.msra.mxu0 %v1001
        %1025 = vmatprep.subr.bf16.mxu0 0
        %1026 = vmatpush1.bf16.msra.mxu0 %v1002
        %1027 = vmatprep.subr.bf16.mxu0 0
        %1028 = vmatpush1.bf16.msra.mxu0 0
        %1029 = vmatprep.subr.bf16.mxu0 0
        %1030 = vmatpush1.bf16.msra.mxu0 0
        %1031 = vmatprep.subr.bf16.mxu0 0
        %1032 = vmatpush1.bf16.msra.mxu0 0
        %1033 = vmatprep.subr.bf16.mxu0 0
        %1034 = vmatpush1.bf16.msra.mxu0 0
        %1035 = vmatprep.subr.bf16.mxu0 0
        %1036 = vmatpush1.bf16.msra.mxu0 0
        %1037 = vmatprep.subr.bf16.mxu0 0
        %1038 = vmatpush1.bf16.msra.mxu0 0
        %1039 = vmatprep.subr.bf16.mxu0 0
        %1040 = vmatpush1.bf16.msra.mxu0 0
        %1041 = vmatprep.subr.bf16.mxu0 0
        %1042 = vmatpush1.bf16.msra.mxu0 0
        %1043 = vmatprep.mubr.bf16.mxu0 0
        %1044 = vmatmul.mubr.bf16.gmra.mrb[0].mxu0 %v530
        %v1045 = vpop.f32.mrb[0].mxu0
        %v1046 = vadd.f32 %v837, %v1045
        %v1047 = vpop.f32.mrb[0].mxu0
        %v1048 = vpop.f32.mrb[0].mxu0
        %v1049 = vadd.f32 %v840, %v1048
        %v1050 = vpop.f32.mrb[0].mxu0
        %1051 = vmatprep.mubr.bf16.mxu0 0
        %1052 = vmatmul.mubr.bf16.gmra.mrb[0].mxu0 %v531
        %v1053 = vpop.f32.mrb[0].mxu0
        %v1054 = vadd.f32 %v845, %v1053
        %v1055 = vpop.f32.mrb[0].mxu0
        %v1056 = vpop.f32.mrb[0].mxu0
        %v1057 = vadd.f32 %v848, %v1056
        %v1058 = vpop.f32.mrb[0].mxu0
        %1059 = vmatprep.mubr.bf16.mxu0 0
        %1060 = vmatmul.mubr.bf16.gmra.mrb[0].mxu0 %v532
        %v1061 = vpop.f32.mrb[0].mxu0
        %v1062 = vadd.f32 %v853, %v1061
        %v1063 = vpop.f32.mrb[0].mxu0
        %v1064 = vpop.f32.mrb[0].mxu0
        %v1065 = vadd.f32 %v856, %v1064
        %v1066 = vpop.f32.mrb[0].mxu0
        %1067 = vmatprep.mubr.bf16.mxu0 0
        %1068 = vmatmul.mubr.bf16.gmra.mrb[0].mxu0 %v533
        %v1069 = vpop.f32.mrb[0].mxu0
        %v1070 = vadd.f32 %v861, %v1069
        %v1071 = vpop.f32.mrb[0].mxu0
        %v1072 = vpop.f32.mrb[0].mxu0
        %v1073 = vadd.f32 %v864, %v1072
        %v1074 = vpop.f32.mrb[0].mxu0
        %1075 = vmatprep.mubr.bf16.mxu0 0
        %1076 = vmatmul.mubr.bf16.gmra.mrb[0].mxu0 %v534
        %v1077 = vpop.f32.mrb[0].mxu0
        %v1078 = vadd.f32 %v869, %v1077
        %v1079 = vpop.f32.mrb[0].mxu0
        %v1080 = vpop.f32.mrb[0].mxu0
        %v1081 = vadd.f32 %v872, %v1080
        %v1082 = vpop.f32.mrb[0].mxu0
        %1083 = vmatprep.mubr.bf16.mxu0 0
        %1084 = vmatmul.mubr.bf16.gmra.mrb[0].mxu0 %v535
        %v1085 = vpop.f32.mrb[0].mxu0
        %v1086 = vadd.f32 %v877, %v1085
        %v1087 = vpop.f32.mrb[0].mxu0
        %v1088 = vpop.f32.mrb[0].mxu0
        %v1089 = vadd.f32 %v880, %v1088
        %v1090 = vpop.f32.mrb[0].mxu0
        %1091 = vmatprep.mubr.bf16.mxu0 0
        %1092 = vmatmul.mubr.bf16.gmra.mrb[0].mxu0 %v536
        %v1093 = vpop.f32.mrb[0].mxu0
        %v1094 = vadd.f32 %v885, %v1093
        %v1095 = vpop.f32.mrb[0].mxu0
        %v1096 = vpop.f32.mrb[0].mxu0
        %v1097 = vadd.f32 %v888, %v1096
        %v1098 = vpop.f32.mrb[0].mxu0
        %1099 = vmatprep.mubr.bf16.mxu0 0
        %1100 = vmatmul.mubr.bf16.gmra.mrb[0].mxu0 %v537
        %v1101 = vpop.f32.mrb[0].mxu0
        %v1102 = vadd.f32 %v893, %v1101
        %v1103 = vpop.f32.mrb[0].mxu0
        %v1104 = vpop.f32.mrb[0].mxu0
        %v1105 = vadd.f32 %v896, %v1104
        %v1106 = vpop.f32.mrb[0].mxu0
        %1107 = vmatprep.mubr.bf16.mxu0 0
        %1108 = vmatmul.mubr.bf16.gmra.mrb[0].mxu0 %v538
        %v1109 = vpop.f32.mrb[0].mxu0
        %v1110 = vadd.f32 %v901, %v1109
        %v1111 = vpop.f32.mrb[0].mxu0
        %v1112 = vpop.f32.mrb[0].mxu0
        %v1113 = vadd.f32 %v904, %v1112
        %v1114 = vpop.f32.mrb[0].mxu0
        %1115 = vmatprep.mubr.bf16.mxu0 0
        %1116 = vmatmul.mubr.bf16.gmra.mrb[0].mxu0 %v539
        %v1117 = vpop.f32.mrb[0].mxu0
        %v1118 = vadd.f32 %v909, %v1117
        %v1119 = vpop.f32.mrb[0].mxu0
        %v1120 = vpop.f32.mrb[0].mxu0
        %v1121 = vadd.f32 %v912, %v1120
        %v1122 = vpop.f32.mrb[0].mxu0
        %1123 = vmatprep.mubr.bf16.mxu0 0
        %1124 = vmatmul.mubr.bf16.gmra.mrb[0].mxu0 %v540
        %v1125 = vpop.f32.mrb[0].mxu0
        %v1126 = vadd.f32 %v917, %v1125
        %v1127 = vpop.f32.mrb[0].mxu0
        %v1128 = vpop.f32.mrb[0].mxu0
        %v1129 = vadd.f32 %v920, %v1128
        %v1130 = vpop.f32.mrb[0].mxu0
        %1131 = vmatprep.mubr.bf16.mxu0 0
        %1132 = vmatmul.mubr.bf16.gmra.mrb[0].mxu0 %v541
        %v1133 = vpop.f32.mrb[0].mxu0
        %v1134 = vadd.f32 %v925, %v1133
        %v1135 = vpop.f32.mrb[0].mxu0
        %v1136 = vpop.f32.mrb[0].mxu0
        %v1137 = vadd.f32 %v928, %v1136
        %v1138 = vpop.f32.mrb[0].mxu0
        %1139 = vmatprep.mubr.bf16.mxu0 0
        %1140 = vmatmul.mubr.bf16.gmra.mrb[0].mxu0 %v542
        %v1141 = vpop.f32.mrb[0].mxu0
        %v1142 = vadd.f32 %v933, %v1141
        %v1143 = vpop.f32.mrb[0].mxu0
        %v1144 = vpop.f32.mrb[0].mxu0
        %v1145 = vadd.f32 %v936, %v1144
        %v1146 = vpop.f32.mrb[0].mxu0
        %1147 = vmatprep.mubr.bf16.mxu0 0
        %1148 = vmatmul.mubr.bf16.gmra.mrb[0].mxu0 %v543
        %v1149 = vpop.f32.mrb[0].mxu0
        %v1150 = vadd.f32 %v941, %v1149
        %v1151 = vpop.f32.mrb[0].mxu0
        %v1152 = vpop.f32.mrb[0].mxu0
        %v1153 = vadd.f32 %v944, %v1152
        %v1154 = vpop.f32.mrb[0].mxu0
        %1155 = vmatprep.mubr.bf16.mxu0 0
        %1156 = vmatmul.mubr.bf16.gmra.mrb[0].mxu0 %v544
        %v1157 = vpop.f32.mrb[0].mxu0
        %v1158 = vadd.f32 %v949, %v1157
        %v1159 = vpop.f32.mrb[0].mxu0
        %v1160 = vpop.f32.mrb[0].mxu0
        %v1161 = vadd.f32 %v952, %v1160
        %v1162 = vpop.f32.mrb[0].mxu0
        %1163 = vmatprep.mubr.bf16.mxu0 0
        %1164 = vmatmul.mubr.bf16.gmra.mrb[0].mxu0 %v545
        %v1165 = vpop.f32.mrb[0].mxu0
        %v1166 = vadd.f32 %v957, %v1165
        %v1167 = vpop.f32.mrb[0].mxu0
        %v1168 = vpop.f32.mrb[0].mxu0
        %v1169 = vadd.f32 %v960, %v1168
        %v1170 = vpop.f32.mrb[0].mxu0
        %1171 = vdwg.mxu0
        %v1172 = vld [vmem:[%s4] sm:$0x1]
        %v1174 = vlaneseq
        %v1175 = vshrl.u32 %v1174, 7
        %v1176 = vsub.s32 0, %v1175
        %v1177 = vrot.slane %v1172, %v1176
        %v1179 = vadd.f32 %v1046, %v1177
        %v1180 = vadd.f32 %v1049, %v1177
        %v1181 = vadd.f32 %v1054, %v1177
        %v1182 = vadd.f32 %v1057, %v1177
        %v1183 = vadd.f32 %v1062, %v1177
        %v1184 = vadd.f32 %v1065, %v1177
        %v1185 = vadd.f32 %v1070, %v1177
        %v1186 = vadd.f32 %v1073, %v1177
        %v1187 = vadd.f32 %v1078, %v1177
        %v1188 = vadd.f32 %v1081, %v1177
        %v1189 = vadd.f32 %v1086, %v1177
        %v1190 = vadd.f32 %v1089, %v1177
        %v1191 = vadd.f32 %v1094, %v1177
        %v1192 = vadd.f32 %v1097, %v1177
        %v1193 = vadd.f32 %v1102, %v1177
        %v1194 = vadd.f32 %v1105, %v1177
        %v1195 = vadd.f32 %v1110, %v1177
        %v1196 = vadd.f32 %v1113, %v1177
        %v1197 = vadd.f32 %v1118, %v1177
        %v1198 = vadd.f32 %v1121, %v1177
        %v1199 = vadd.f32 %v1126, %v1177
        %v1200 = vadd.f32 %v1129, %v1177
        %v1201 = vadd.f32 %v1134, %v1177
        %v1202 = vadd.f32 %v1137, %v1177
        %v1203 = vadd.f32 %v1142, %v1177
        %v1204 = vadd.f32 %v1145, %v1177
        %v1205 = vadd.f32 %v1150, %v1177
        %v1206 = vadd.f32 %v1153, %v1177
        %v1207 = vadd.f32 %v1158, %v1177
        %v1208 = vadd.f32 %v1161, %v1177
        %v1209 = vadd.f32 %v1166, %v1177
        %v1210 = vadd.f32 %v1169, %v1177
        %vm1211 = vcmp.ge.f32.partialorder %v1179, 0.0
        %vm1212 = vcmp.ge.f32.partialorder %v1180, 0.0
        %vm1213 = vcmp.ge.f32.partialorder %v1181, 0.0
        %vm1214 = vcmp.ge.f32.partialorder %v1182, 0.0
        %vm1215 = vcmp.ge.f32.partialorder %v1183, 0.0
        %vm1216 = vcmp.ge.f32.partialorder %v1184, 0.0
        %vm1217 = vcmp.ge.f32.partialorder %v1185, 0.0
        %vm1218 = vcmp.ge.f32.partialorder %v1186, 0.0
        %vm1219 = vcmp.ge.f32.partialorder %v1187, 0.0
        %vm1220 = vcmp.ge.f32.partialorder %v1188, 0.0
        %vm1221 = vcmp.ge.f32.partialorder %v1189, 0.0
        %vm1222 = vcmp.ge.f32.partialorder %v1190, 0.0
        %vm1223 = vcmp.ge.f32.partialorder %v1191, 0.0
        %vm1224 = vcmp.ge.f32.partialorder %v1192, 0.0
        %vm1225 = vcmp.ge.f32.partialorder %v1193, 0.0
        %vm1226 = vcmp.ge.f32.partialorder %v1194, 0.0
        %vm1227 = vcmp.ge.f32.partialorder %v1195, 0.0
        %vm1228 = vcmp.ge.f32.partialorder %v1196, 0.0
        %vm1229 = vcmp.ge.f32.partialorder %v1197, 0.0
        %vm1230 = vcmp.ge.f32.partialorder %v1198, 0.0
        %vm1231 = vcmp.ge.f32.partialorder %v1199, 0.0
        %vm1232 = vcmp.ge.f32.partialorder %v1200, 0.0
        %vm1233 = vcmp.ge.f32.partialorder %v1201, 0.0
        %vm1234 = vcmp.ge.f32.partialorder %v1202, 0.0
        %vm1235 = vcmp.ge.f32.partialorder %v1203, 0.0
        %vm1236 = vcmp.ge.f32.partialorder %v1204, 0.0
        %vm1237 = vcmp.ge.f32.partialorder %v1205, 0.0
        %vm1238 = vcmp.ge.f32.partialorder %v1206, 0.0
        %vm1239 = vcmp.ge.f32.partialorder %v1207, 0.0
        %vm1240 = vcmp.ge.f32.partialorder %v1208, 0.0
        %vm1241 = vcmp.ge.f32.partialorder %v1209, 0.0
        %vm1242 = vcmp.ge.f32.partialorder %v1210, 0.0
        %v1243 = vmul.f32 %v1179, 0.01
        %v1244 = vmul.f32 %v1180, 0.01
        %v1245 = vmul.f32 %v1181, 0.01
        %v1246 = vmul.f32 %v1182, 0.01
        %v1247 = vmul.f32 %v1183, 0.01
        %v1248 = vmul.f32 %v1184, 0.01
        %v1249 = vmul.f32 %v1185, 0.01
        %v1250 = vmul.f32 %v1186, 0.01
        %v1251 = vmul.f32 %v1187, 0.01
        %v1252 = vmul.f32 %v1188, 0.01
        %v1253 = vmul.f32 %v1189, 0.01
        %v1254 = vmul.f32 %v1190, 0.01
        %v1255 = vmul.f32 %v1191, 0.01
        %v1256 = vmul.f32 %v1192, 0.01
        %v1257 = vmul.f32 %v1193, 0.01
        %v1258 = vmul.f32 %v1194, 0.01
        %v1259 = vmul.f32 %v1195, 0.01
        %v1260 = vmul.f32 %v1196, 0.01
        %v1261 = vmul.f32 %v1197, 0.01
        %v1262 = vmul.f32 %v1198, 0.01
        %v1263 = vmul.f32 %v1199, 0.01
        %v1264 = vmul.f32 %v1200, 0.01
        %v1265 = vmul.f32 %v1201, 0.01
        %v1266 = vmul.f32 %v1202, 0.01
        %v1267 = vmul.f32 %v1203, 0.01
        %v1268 = vmul.f32 %v1204, 0.01
        %v1269 = vmul.f32 %v1205, 0.01
        %v1270 = vmul.f32 %v1206, 0.01
        %v1271 = vmul.f32 %v1207, 0.01
        %v1272 = vmul.f32 %v1208, 0.01
        %v1273 = vmul.f32 %v1209, 0.01
        %v1274 = vmul.f32 %v1210, 0.01
        %v1275 = vsel %vm1211, %v1179, %v1243
        %v1276 = vsel %vm1212, %v1180, %v1244
        %v1277 = vsel %vm1213, %v1181, %v1245
        %v1278 = vsel %vm1214, %v1182, %v1246
        %v1279 = vsel %vm1215, %v1183, %v1247
        %v1280 = vsel %vm1216, %v1184, %v1248
        %v1281 = vsel %vm1217, %v1185, %v1249
        %v1282 = vsel %vm1218, %v1186, %v1250
        %v1283 = vsel %vm1219, %v1187, %v1251
        %v1284 = vsel %vm1220, %v1188, %v1252
        %v1285 = vsel %vm1221, %v1189, %v1253
        %v1286 = vsel %vm1222, %v1190, %v1254
        %v1287 = vsel %vm1223, %v1191, %v1255
        %v1288 = vsel %vm1224, %v1192, %v1256
        %v1289 = vsel %vm1225, %v1193, %v1257
        %v1290 = vsel %vm1226, %v1194, %v1258
        %v1291 = vsel %vm1227, %v1195, %v1259
        %v1292 = vsel %vm1228, %v1196, %v1260
        %v1293 = vsel %vm1229, %v1197, %v1261
        %v1294 = vsel %vm1230, %v1198, %v1262
        %v1295 = vsel %vm1231, %v1199, %v1263
        %v1296 = vsel %vm1232, %v1200, %v1264
        %v1297 = vsel %vm1233, %v1201, %v1265
        %v1298 = vsel %vm1234, %v1202, %v1266
        %v1299 = vsel %vm1235, %v1203, %v1267
        %v1300 = vsel %vm1236, %v1204, %v1268
        %v1301 = vsel %vm1237, %v1205, %v1269
        %v1302 = vsel %vm1238, %v1206, %v1270
        %v1303 = vsel %vm1239, %v1207, %v1271
        %v1304 = vsel %vm1240, %v1208, %v1272
        %v1305 = vsel %vm1241, %v1209, %v1273
        %v1306 = vsel %vm1242, %v1210, %v1274
        %v1307 = vld [vmem:[%s5] sm:$0x1]
        %v1308 = vpack.c.bf16 %v1276, %v1275
        %v1309 = vpack.c.bf16 %v1278, %v1277
        %v1310 = vpack.c.bf16 %v1280, %v1279
        %v1311 = vpack.c.bf16 %v1282, %v1281
        %v1312 = vpack.c.bf16 %v1284, %v1283
        %v1313 = vpack.c.bf16 %v1286, %v1285
        %v1314 = vpack.c.bf16 %v1288, %v1287
        %v1315 = vpack.c.bf16 %v1290, %v1289
        %v1316 = vpack.c.bf16 %v1292, %v1291
        %v1317 = vpack.c.bf16 %v1294, %v1293
        %v1318 = vpack.c.bf16 %v1296, %v1295
        %v1319 = vpack.c.bf16 %v1298, %v1297
        %v1320 = vpack.c.bf16 %v1300, %v1299
        %v1321 = vpack.c.bf16 %v1302, %v1301
        %v1322 = vpack.c.bf16 %v1304, %v1303
        %v1323 = vpack.c.bf16 %v1306, %v1305
        %s1324 = sld [smem:[#allocation2]]
        %v1325 = vstv %s1324
        %1326 = vmatprep.subr.bf16.mxu0 0
        %1327 = vmatpush1.bf16.xpose.msra.mxu0 %v1308
        %1328 = vmatprep.subr.bf16.mxu0 0
        %1329 = vmatpush1.bf16.xpose.msra.mxu0 %v1309
        %1330 = vmatprep.subr.bf16.mxu0 0
        %1331 = vmatpush1.bf16.xpose.msra.mxu0 %v1310
        %1332 = vmatprep.subr.bf16.mxu0 0
        %1333 = vmatpush1.bf16.xpose.msra.mxu0 %v1311
        %1334 = vmatprep.subr.bf16.mxu0 0
        %1335 = vmatpush1.bf16.xpose.msra.mxu0 %v1312
        %1336 = vmatprep.subr.bf16.mxu0 0
        %1337 = vmatpush1.bf16.xpose.msra.mxu0 %v1313
        %1338 = vmatprep.subr.bf16.mxu0 0
        %1339 = vmatpush1.bf16.xpose.msra.mxu0 %v1314
        %1340 = vmatprep.subr.bf16.mxu0 0
        %1341 = vmatpush1.bf16.xpose.msra.mxu0 %v1315
        %1342 = vmatprep.subr.bf16.mxu0 0
        %1343 = vmatpush1.bf16.xpose.msra.mxu0 %v1316
        %1344 = vmatprep.subr.bf16.mxu0 0
        %1345 = vmatpush1.bf16.xpose.msra.mxu0 %v1317
        %1346 = vmatprep.subr.bf16.mxu0 0
        %1347 = vmatpush1.bf16.xpose.msra.mxu0 %v1318
        %1348 = vmatprep.subr.bf16.mxu0 0
        %1349 = vmatpush1.bf16.xpose.msra.mxu0 %v1319
        %1350 = vmatprep.subr.bf16.mxu0 0
        %1351 = vmatpush1.bf16.xpose.msra.mxu0 %v1320
        %1352 = vmatprep.subr.bf16.mxu0 0
        %1353 = vmatpush1.bf16.xpose.msra.mxu0 %v1321
        %1354 = vmatprep.subr.bf16.mxu0 0
        %1355 = vmatpush1.bf16.xpose.msra.mxu0 %v1322
        %1356 = vmatprep.subr.bf16.mxu0 0
        %1357 = vmatpush1.bf16.xpose.msra.mxu0 %v1323
        %1358 = vmatprep.mubr.bf16.mxu0 0
        %1359 = vmatmul.mubr.bf16.gmra.mrb[0].mxu0 %v1307
        %v1360 = vpop.f32.mrb[0].mxu0
        %v1361 = vadd.f32 %v1325, %v1360
        %v1362 = vpop.f32.mrb[0].mxu0
        %v1363 = vadd.f32 %v1325, %v1362
        %v1364 = vpop.f32.mrb[0].mxu0
        %v1365 = vpop.f32.mrb[0].mxu0
        %1366 = vdwg.mxu0
        %v1367 = vsub.f32 0.0, %v1361
        %v1368 = vsub.f32 0.0, %v1363
        %v1369 = vmul.f32 %v1367, 1.442695
        %v1370 = vpow.pop %v1369
        %v1371 = vmul.f32 %v1368, 1.442695
        %v1372 = vpow.pop %v1371
        %v1373 = vadd.f32 %v1370, 1.0
        %v1374 = vadd.f32 %v1372, 1.0
        %v1375 = vrcp.pop %v1373
        %v1376 = vrcp.pop %v1374
        %v1377 = vmul.f32 %v1375, 4.0
        %v1378 = vmul.f32 %v1376, 4.0
        %v1379 = vadd.f32 %v1377, 1.0
        %v1380 = vadd.f32 %v1378, 1.0
        %v1383 = vcombine.low %v1379, %v1380
        %v1385 = vunpack.c.l.s4 1966171168
        %v1386 = vunpack.c.0.s8 %v1385
        %v1387 = vlaneseq
        %v1388 = vshrl.u32 %v1387, 7
        %v1389 = vsub.s32 %v1386, %v1388
        %v1390 = vrot.slane %v1383, %v1389
        %v1392 = vunpack.c.l.s4 1966171168
        %v1393 = vunpack.c.0.s8 %v1392
        %v1394 = vlaneseq
        %v1395 = vshrl.u32 %v1394, 7
        %v1396 = vsub.s32 %v1393, %v1395
        %v1397 = vrot.slane %v1390, %v1396
        %v1399 = vlaneseq
        %vm1400 = vcmp.ge.s32.totalorder %v1399, 0
        %vm1401 = vcmp.lt.s32.totalorder %v1399, 256
        %vm1402 = vmand %vm1400, %vm1401
        %1403 = vst.msk [vmem:[%s289] sm:$0x3] %vm1402, %v1397
        %s1404 = sand.u32 %s187, 1
        %s1405 = scalar_lea.sflag [#allocation4], %s1404
        %s1406 = sand.u32 %s187, 1
        %s1407 = smul.addr %s1406, 2
        %s1408 = scalar_lea.vmem [#allocation3], %s1407
        // Predicated region
        $region49: #{tpu_custom_call.1} parent=47 // pred_check
          %p1409 = pneg %p197
        $region50: #{tpu_custom_call.1} parent=47 // pred_check_branch
          %1411 = sbr.rel (%p1409) target = $region52
        $region51: #{tpu_custom_call.1} parent=47 // pred_region
          %s1412 = smul.u32 2, %s22
          %s1414 = ssub.s32 32, 32
          %1415 = vsyncadd %s1405, %s1414
          %s1416 = smul.addr %s1412, 16
          %s1417 = scalar_lea.hbm %s7, %s1416
          %s1419 = sshll.u32 %s1408, 4
          %s1420 = int_to_ptr.vmem [resolvable:$true] %s1419
          %1422 = dma.vmem_to_hbm [thread:$0]  %s1420, 32, %s1417, %s1405
        $region52: #{tpu_custom_call.1} parent=47 // pred_fallthru
          _
      $region48: #{tpu_custom_call.1} parent=5 // pred_fallthru
        _
      %p1423 = scmp.le.s32.totalorder 2, %s17
      // Predicated region
      $region53: #{tpu_custom_call.1} parent=5 // pred_check
        %p1424 = pneg %p1423
      $region54: #{tpu_custom_call.1} parent=5 // pred_check_branch
        %1426 = sbr.rel (%p1424) target = $region56
      $region55: #{tpu_custom_call.1} parent=5 // pred_region
        %s1427 = ssub.s32 %s17, 2
        // Predicated region
        $region57: #{tpu_custom_call.1} parent=55 // pred_check
          %p1428 = pneg %p203
        $region58: #{tpu_custom_call.1} parent=55 // pred_check_branch
          %1430 = sbr.rel (%p1428) target = $region60
        $region59: #{tpu_custom_call.1} parent=55 // pred_region
          %s1431 = sand.u32 %s188, 1
          %s1432 = scalar_lea.sflag [#allocation4], %s1431
          %s1433 = sand.u32 %s188, 1
          %s1434 = smul.addr %s1433, 2
          %s1435 = scalar_lea.vmem [#allocation3], %s1434
          %1436 = dma.done %s1432, 32
        $region60: #{tpu_custom_call.1} parent=55 // pred_fallthru
          _
      $region56: #{tpu_custom_call.1} parent=5 // pred_fallthru
        _
    $region6: #{tpu_custom_call.1} parent=1 // loop_footer
      %s21 = sadd.s32 1, %s17
    $region7: #{tpu_custom_call.1} parent=1 // loop_footer_branch
      %16 = sbr.rel target = $region3
    $region8: #{tpu_custom_call.1} parent=1 // loop_exit
      _
    %1437 = vsyncpa [#allocation4], 1
    %s1438 = scalar_lea.sflag [#allocation4], 1
    %1439 = vsyncpa %s1438, 1

</llo_original>
